<compile_context>
chip_gen: v7x
topology: tpu7x:2x2x1
jax: 0.10.0
libtpu: 0.0.40
codegen_flags: <defaults>
</compile_context>

<pallas_src>
import math
import numpy as np
import jax
import jax.numpy as jnp
from jax.experimental import pallas as pl
from jax.experimental.pallas import tpu as pltpu

A_CUBIC = -0.75  # torch bicubic grid_sample coefficient


def _cubic_weights(t):
    """Cubic-convolution weights (A=-0.75) for taps floor-1 .. floor+2 (torch order)."""
    A = A_CUBIC

    def cc1(x):
        return ((A + 2.0) * x - (A + 3.0)) * x * x + 1.0

    def cc2(x):
        return ((A * x - 5.0 * A) * x + 8.0 * A) * x - 4.0 * A

    return cc2(t + 1.0), cc1(t), cc1(1.0 - t), cc2(2.0 - t)


def _round_up(x, m):
    return -(-x // m) * m


def make_embeddings_kernel(B, C, H, W, P, hidden, dof, TB):
    PP = P * P
    HW = H * W
    inv = 2.0 / float(P - 1) if P > 1 else 0.0  # TODO(synk): P==1 matches torch.linspace(-1,1,1)

    def kernel(cfg_smem, pix_ref, pos_ref, cw_ref, out_ref, patch_sc):
        n = pl.program_id(0)
        # Number of real (non-padding) images in this tile; padded rows are skipped.
        n_valid = jnp.minimum(TB, jnp.maximum(0, B - n * TB))

        @pl.loop(0, n_valid)
        def _(i):
            base = (n * TB + i) * dof
            t0 = cfg_smem[base + 0]      # translation along x (width)
            t1 = cfg_smem[base + 1]      # translation along y (height)
            # TODO(synk): 'scaling' / 'non_uniform_scaling' affine modes not implemented.

            # Patch-kernel coordinates per lane (a = kernel row / y, b = kernel col / x).
            lane = jax.lax.broadcasted_iota(jnp.int32, (1, PP), 1).astype(jnp.float32)
            a = jnp.floor(lane / float(P))
            b = lane - a * float(P)

            # Source-pixel coordinates per scratch row (h = image row, w = image col).
            rowv = jax.lax.broadcasted_iota(jnp.int32, (HW, PP), 0).astype(jnp.float32)
            h = jnp.floor(rowv / float(W))
            w = rowv - h * float(W)

            # align_corners=False un-normalization of the translated sampling grid.
            ix = (inv * b + t0) * (0.5 * float(W)) - 0.5            # (1, PP)
            iy = (inv * a + t1) * (0.5 * float(H)) - 0.5            # (1, PP)
            ix0 = jnp.floor(ix)
            iy0 = jnp.floor(iy)
            wx0, wx1, wx2, wx3 = _cubic_weights(ix - ix0)
            wy0, wy1, wy2, wy3 = _cubic_weights(iy - iy0)

            # One-hot separable bicubic weights combined into (HW, PP); out-of-bounds
            # taps never match a source index -> padding_mode='zeros'.
            dx = w - ix0                                            # (HW, PP)
            dy = h - iy0                                            # (HW, PP)
            ax = (jnp.where(dx == -1.0, wx0, 0.0) + jnp.where(dx == 0.0, wx1, 0.0)
                  + jnp.where(dx == 1.0, wx2, 0.0) + jnp.where(dx == 2.0, wx3, 0.0))
            ay = (jnp.where(dy == -1.0, wy0, 0.0) + jnp.where(dy == 0.0, wy1, 0.0)
                  + jnp.where(dy == 1.0, wy2, 0.0) + jnp.where(dy == 2.0, wy3, 0.0))
            wcomb = ax * ay                                         # (HW, PP) f32

            # One lane-dense resampling GEMM for all channels of this image; the
            # (C, PP) result is stored as a single dense slab of the patch scratch.
            patch_sc[i] = jnp.dot(pix_ref[i], wcomb,
                                  preferred_element_type=jnp.float32)

        # Tile-wide projection: K=PP GEMM accumulated over channels (no relayout of the
        # (TB, C, PP) scratch), on top of the precomputed pos-embedding + bias block.
        acc = pos_ref[...]
        for c in range(C):
            acc = acc + jnp.dot(patch_sc[:, c, :], cw_ref[c],
                                preferred_element_type=jnp.float32)
        # TODO(synk): dropout omitted (identity at eval / hidden_dropout_prob == 0).
        out_ref[...] = acc.astype(out_ref.dtype)

    return kernel


def saccadic_vit_embeddings(pixel_values, patch_config, params, patch_size, tb_max=64):
    B, C, H, W = pixel_values.shape
    P = patch_size
    PP = P * P
    HW = H * W
    hidden = params["conv_w"].shape[0]
    dof = patch_config.shape[-1]

    # --- VMEM budget (generation aware: v7x 64 MiB, v5e/v6e 128 MiB) ---
    vmem_cap = 64 << 20
    try:
        vmem_cap = int(getattr(pltpu.get_tpu_info(), "vmem_capacity_bytes", vmem_cap))
    except Exception:
        pass

    # --- batch-tile selection: multiple of 8, >=2 grid steps when B > 8 (both v7x
    #     TensorCores), capped so the f32 pixel double-buffer uses <= ~1/4 of VMEM. ---
    pix_tile_bytes = C * HW * 4
    tb_vmem = max(8, ((vmem_cap // 4) // (2 * pix_tile_bytes)) // 8 * 8)
    if B <= 8:
        TB = 8
    else:
        TB = max(8, min(tb_max, tb_vmem, _round_up(_round_up(B, 2) // 2, 8)))
    B_pad = _round_up(B, TB)

    # Layout plumbing only (no dtype round trip): NCHW is contiguous as (B, C, H*W).
    pix = pixel_values.reshape(B, C, HW).astype(jnp.float32)
    cfg = patch_config.astype(jnp.float32)

    # Positional embedding + all biases precomputed in plain XLA (K=dof GEMM is pure
    # MXU push/pop latency in-kernel); becomes a per-row additive block.
    pos = (cfg @ params["pe_w"].T.astype(jnp.float32)
           + params["pe_b"].astype(jnp.float32)
           + params["conv_b"].astype(jnp.float32))                        # (B, hidden)

    if B_pad != B:
        pix = jnp.pad(pix, ((0, B_pad - B), (0, 0), (0, 0)))
        cfg = jnp.pad(cfg, ((0, B_pad - B), (0, 0)))
        pos = jnp.pad(pos, ((0, B_pad - B), (0, 0)))
    cfg_flat = cfg.reshape(B_pad * dof)                                   # flat 1-D SMEM scalars

    # Conv weight as (C, PP, hidden): projection = C accumulated GEMMs, no in-kernel
    # relayout of the (TB, C, PP) patch scratch.
    cw = jnp.transpose(params["conv_w"].reshape(hidden, C, PP), (1, 2, 0)).astype(jnp.float32)

    kernel = make_embeddings_kernel(B, C, H, W, P, hidden, dof, TB)

    est = (2 * TB * C * HW * 4          # double-buffered f32 pixel tile
           + C * PP * hidden * 4        # resident conv weight
           + 2 * 2 * TB * hidden * 4    # pos + out blocks (double buffered)
           + TB * C * PP * 4            # patch scratch
           + 2 * HW * PP * 4)           # in-kernel weight-build temporaries
    vmem_limit = max(min(int(0.8 * vmem_cap), max(32 << 20, 4 * est)), 2 * est)
    vmem_limit = int(min(vmem_limit, int(0.9 * vmem_cap)))

    out = pl.pallas_call(
        kernel,
        out_shape=jax.ShapeDtypeStruct((B_pad, hidden), jnp.float32),
        grid=(B_pad // TB,),
        in_specs=[
            pl.BlockSpec(memory_space=pltpu.MemorySpace.SMEM),       # patch_config, flat scalars
            # TODO(synk): sweep pipeline_mode=pl.Buffered(3) on v5e/v6e at real image
            # sizes if the pixel DMA is latency exposed.
            pl.BlockSpec((TB, C, HW), lambda n: (n, 0, 0)),          # pixels (f32, lane-dense)
            pl.BlockSpec((TB, hidden), lambda n: (n, 0)),            # pos embedding + biases
            pl.BlockSpec(memory_space=pltpu.MemorySpace.VMEM),       # conv weight (C, PP, hidden)
        ],
        out_specs=pl.BlockSpec((TB, hidden), lambda n: (n, 0)),
        scratch_shapes=[pltpu.VMEM((TB, C, PP), jnp.float32)],
        compiler_params=pltpu.CompilerParams(
            dimension_semantics=("parallel",),
            vmem_limit_bytes=vmem_limit,
        ),
    )(cfg_flat, pix, pos, cw)
    return out[:B]


def reference_embeddings(pixel_values, patch_config, conv_w, conv_b, pe_w, pe_b, P):
    """Pure-JAX (non-Pallas) reference with identical math, for a sanity check."""
    B, C, H, W = pixel_values.shape
    lin = jnp.linspace(-1.0, 1.0, P)
    t0 = patch_config[:, 0][:, None, None]
    t1 = patch_config[:, 1][:, None, None]
    x = jnp.broadcast_to(lin[None, None, :] + t0, (B, P, P))
    y = jnp.broadcast_to(lin[None, :, None] + t1, (B, P, P))

    def sep_weights(coord, size):
        i = ((coord + 1.0) * size - 1.0) * 0.5
        i0 = jnp.floor(i)
        ws = _cubic_weights(i - i0)
        idx = jnp.arange(size, dtype=jnp.float32)
        acc = jnp.zeros(coord.shape + (size,), jnp.float32)
        for q in range(4):
            acc = acc + ws[q][..., None] * (idx == (i0 + (q - 1.0))[..., None]).astype(jnp.float32)
        return acc

    WX = sep_weights(x, W)  # (B, P, P, W)
    WY = sep_weights(y, H)  # (B, P, P, H)
    patches = jnp.einsum('nabh,nabw,nchw->ncab', WY, WX, pixel_values)
    feat = patches.reshape(B, -1) @ conv_w.reshape(conv_w.shape[0], -1).T + conv_b
    pos = patch_config @ pe_w.T + pe_b
    return feat + pos


if __name__ == "__main__":
    C, H, W = 4, 16, 16
    P = 8          # patch_size
    hidden = 32    # hidden_size
    dof = 2        # PATCH_CONFIG_DOF['translation']

    key = jax.random.PRNGKey(0)
    k1, k2, k3, k4, k5, k6 = jax.random.split(key, 6)

    fan_in = C * P * P
    params = dict(
        conv_w=jax.random.normal(k3, (hidden, C, P, P), jnp.float32) / math.sqrt(fan_in),
        conv_b=0.01 * jax.random.normal(k4, (hidden,), jnp.float32),
        pe_w=jax.random.normal(k5, (hidden, dof), jnp.float32) / math.sqrt(dof),
        pe_b=0.01 * jax.random.normal(k6, (hidden,), jnp.float32),
    )

    # Case B=2 : single tile (TB=8), partially valid.
    # Case B=12: TB=8, 2 grid steps, second tile only half valid (padded rows skipped).
    # Case B=24: TB=16 (>8), 2 grid steps -> exercises the larger batch tile path.
    for B in (2, 12, 24):
        kp = jax.random.fold_in(k1, B)
        kc = jax.random.fold_in(k2, B)
        pixel_values = jax.random.normal(kp, (B, C, H, W), jnp.float32)
        patch_config = 0.3 * jax.random.normal(kc, (B, dof), jnp.float32)

        out = saccadic_vit_embeddings(pixel_values, patch_config, params, P)
        out = jax.block_until_ready(out)

        ref = reference_embeddings(pixel_values, patch_config,
                                   params["conv_w"], params["conv_b"],
                                   params["pe_w"], params["pe_b"], P)
        assert out.shape == (B, hidden)
        np.testing.assert_allclose(np.asarray(out), np.asarray(ref), rtol=2e-2, atol=2e-2)

    print("KERNEL_OK")
</pallas_src>

<mosaic_0001>
module attributes {stable_mosaic.version = 11 : i64} {
  func.func @kernel(%arg0: i32, %arg1: memref<16xf32, #tpu.memory_space<smem>>, %arg2: memref<8x4x256xf32, #tpu.memory_space<vmem>>, %arg3: memref<8x32xf32, #tpu.memory_space<vmem>>, %arg4: memref<4x64x32xf32, #tpu.memory_space<vmem>>, %arg5: memref<8x32xf32, #tpu.memory_space<vmem>>, %arg6: memref<8x4x64xf32, #tpu.memory_space<vmem>>) attributes {dimension_semantics = [#tpu.dimension_semantics<parallel>], iteration_bounds = array<i64: 1>, scalar_prefetch = 0 : i64, scratch_operands = 1 : i64, tpu.core_type = #tpu.core_type<tc>, window_params = [{transform_indices = @transform_0, window_bounds = array<i64: 16>}, {transform_indices = @transform_1, window_bounds = array<i64: 8, 4, 256>}, {transform_indices = @transform_2, window_bounds = array<i64: 8, 32>}, {pipeline_mode = #tpu.pipeline_mode<synchronous>, transform_indices = @transform_3, window_bounds = array<i64: 4, 64, 32>}, {transform_indices = @transform_4, window_bounds = array<i64: 8, 32>}]} {
    %c8_i32 = arith.constant 8 : i32
    %0 = arith.muli %arg0, %c8_i32 : i32
    %c2_i32 = arith.constant 2 : i32
    %1 = arith.subi %c2_i32, %0 : i32
    %c0_i32 = arith.constant 0 : i32
    %2 = arith.maxsi %c0_i32, %1 : i32
    %c8_i32_0 = arith.constant 8 : i32
    %3 = arith.minsi %c8_i32_0, %2 : i32
    %c0_i32_1 = arith.constant 0 : i32
    %4 = arith.subi %3, %c0_i32_1 : i32
    %c1_i32 = arith.constant 1 : i32
    %c1_i32_2 = arith.constant 1 : i32
    %5 = arith.subi %c1_i32, %c1_i32_2 : i32
    %6 = arith.addi %4, %5 : i32
    %c1_i32_3 = arith.constant 1 : i32
    %7 = arith.divsi %6, %c1_i32_3 : i32
    %c1_i32_4 = arith.constant 1 : i32
    %c0_i32_5 = arith.constant 0 : i32
    %c0_i32_6 = arith.constant 0 : i32
    %8 = arith.subi %7, %c0_i32_6 : i32
    %9 = arith.addi %c0_i32_6, %8 : i32
    %c1_i32_7 = arith.constant 1 : i32
    scf.for %arg7 = %c0_i32_6 to %9 step %c1_i32_7  : i32 {
      %36 = arith.muli %arg7, %c1_i32_4 : i32
      %37 = arith.addi %c0_i32_5, %36 : i32
      %c8_i32_35 = arith.constant 8 : i32
      %38 = arith.muli %arg0, %c8_i32_35 : i32
      %39 = arith.addi %38, %37 : i32
      %c2_i32_36 = arith.constant 2 : i32
      %40 = arith.muli %39, %c2_i32_36 : i32
      %c0_i32_37 = arith.constant 0 : i32
      %41 = arith.addi %40, %c0_i32_37 : i32
      %42 = arith.index_cast %41 : i32 to index
      %43 = memref.load %arg1[%42] : memref<16xf32, #tpu.memory_space<smem>>
      %c1_i32_38 = arith.constant 1 : i32
      %44 = arith.addi %40, %c1_i32_38 : i32
      %45 = arith.index_cast %44 : i32 to index
      %46 = memref.load %arg1[%45] : memref<16xf32, #tpu.memory_space<smem>>
      %47 = tpu.iota {dimensions = array<i32: 1>} : vector<1x64xi32>
      %48 = arith.sitofp %47 : vector<1x64xi32> to vector<1x64xf32>
      %cst_39 = arith.constant 8.000000e+00 : f32
      %49 = vector.broadcast %cst_39 : f32 to vector<1x64xf32>
      %50 = arith.divf %48, %49 : vector<1x64xf32>
      %51 = math.floor %50 : vector<1x64xf32>
      %cst_40 = arith.constant 8.000000e+00 : f32
      %52 = vector.broadcast %cst_40 : f32 to vector<1x64xf32>
      %53 = arith.mulf %51, %52 : vector<1x64xf32>
      %54 = arith.subf %48, %53 : vector<1x64xf32>
      %55 = tpu.iota {dimensions = array<i32: 0>} : vector<256x64xi32>
      %56 = arith.sitofp %55 : vector<256x64xi32> to vector<256x64xf32>
      %cst_41 = arith.constant 1.600000e+01 : f32
      %57 = vector.broadcast %cst_41 : f32 to vector<256x64xf32>
      %58 = arith.divf %56, %57 : vector<256x64xf32>
      %59 = math.floor %58 : vector<256x64xf32>
      %cst_42 = arith.constant 1.600000e+01 : f32
      %60 = vector.broadcast %cst_42 : f32 to vector<256x64xf32>
      %61 = arith.mulf %59, %60 : vector<256x64xf32>
      %62 = arith.subf %56, %61 : vector<256x64xf32>
      %cst_43 = arith.constant 0.285714298 : f32
      %63 = vector.broadcast %cst_43 : f32 to vector<1x64xf32>
      %64 = arith.mulf %63, %54 : vector<1x64xf32>
      %65 = vector.broadcast %43 : f32 to vector<1x64xf32>
      %66 = arith.addf %64, %65 : vector<1x64xf32>
      %cst_44 = arith.constant 8.000000e+00 : f32
      %67 = vector.broadcast %cst_44 : f32 to vector<1x64xf32>
      %68 = arith.mulf %66, %67 : vector<1x64xf32>
      %cst_45 = arith.constant 5.000000e-01 : f32
      %69 = vector.broadcast %cst_45 : f32 to vector<1x64xf32>
      %70 = arith.subf %68, %69 : vector<1x64xf32>
      %cst_46 = arith.constant 0.285714298 : f32
      %71 = vector.broadcast %cst_46 : f32 to vector<1x64xf32>
      %72 = arith.mulf %71, %51 : vector<1x64xf32>
      %73 = vector.broadcast %46 : f32 to vector<1x64xf32>
      %74 = arith.addf %72, %73 : vector<1x64xf32>
      %cst_47 = arith.constant 8.000000e+00 : f32
      %75 = vector.broadcast %cst_47 : f32 to vector<1x64xf32>
      %76 = arith.mulf %74, %75 : vector<1x64xf32>
      %cst_48 = arith.constant 5.000000e-01 : f32
      %77 = vector.broadcast %cst_48 : f32 to vector<1x64xf32>
      %78 = arith.subf %76, %77 : vector<1x64xf32>
      %79 = math.floor %70 : vector<1x64xf32>
      %80 = math.floor %78 : vector<1x64xf32>
      %81 = arith.subf %70, %79 : vector<1x64xf32>
      %cst_49 = arith.constant 1.000000e+00 : f32
      %82 = vector.broadcast %cst_49 : f32 to vector<1x64xf32>
      %83 = arith.addf %81, %82 : vector<1x64xf32>
      %cst_50 = arith.constant -7.500000e-01 : f32
      %84 = vector.broadcast %cst_50 : f32 to vector<1x64xf32>
      %85 = arith.mulf %84, %83 : vector<1x64xf32>
      %cst_51 = arith.constant -3.750000e+00 : f32
      %86 = vector.broadcast %cst_51 : f32 to vector<1x64xf32>
      %87 = arith.subf %85, %86 : vector<1x64xf32>
      %88 = arith.mulf %87, %83 : vector<1x64xf32>
      %cst_52 = arith.constant -6.000000e+00 : f32
      %89 = vector.broadcast %cst_52 : f32 to vector<1x64xf32>
      %90 = arith.addf %88, %89 : vector<1x64xf32>
      %91 = arith.mulf %90, %83 : vector<1x64xf32>
      %cst_53 = arith.constant -3.000000e+00 : f32
      %92 = vector.broadcast %cst_53 : f32 to vector<1x64xf32>
      %93 = arith.subf %91, %92 : vector<1x64xf32>
      %cst_54 = arith.constant 1.250000e+00 : f32
      %94 = vector.broadcast %cst_54 : f32 to vector<1x64xf32>
      %95 = arith.mulf %94, %81 : vector<1x64xf32>
      %cst_55 = arith.constant 2.250000e+00 : f32
      %96 = vector.broadcast %cst_55 : f32 to vector<1x64xf32>
      %97 = arith.subf %95, %96 : vector<1x64xf32>
      %98 = arith.mulf %97, %81 : vector<1x64xf32>
      %99 = arith.mulf %98, %81 : vector<1x64xf32>
      %cst_56 = arith.constant 1.000000e+00 : f32
      %100 = vector.broadcast %cst_56 : f32 to vector<1x64xf32>
      %101 = arith.addf %99, %100 : vector<1x64xf32>
      %cst_57 = arith.constant 1.000000e+00 : f32
      %102 = vector.broadcast %cst_57 : f32 to vector<1x64xf32>
      %103 = arith.subf %102, %81 : vector<1x64xf32>
      %cst_58 = arith.constant 1.250000e+00 : f32
      %104 = vector.broadcast %cst_58 : f32 to vector<1x64xf32>
      %105 = arith.mulf %104, %103 : vector<1x64xf32>
      %cst_59 = arith.constant 2.250000e+00 : f32
      %106 = vector.broadcast %cst_59 : f32 to vector<1x64xf32>
      %107 = arith.subf %105, %106 : vector<1x64xf32>
      %108 = arith.mulf %107, %103 : vector<1x64xf32>
      %109 = arith.mulf %108, %103 : vector<1x64xf32>
      %cst_60 = arith.constant 1.000000e+00 : f32
      %110 = vector.broadcast %cst_60 : f32 to vector<1x64xf32>
      %111 = arith.addf %109, %110 : vector<1x64xf32>
      %cst_61 = arith.constant 2.000000e+00 : f32
      %112 = vector.broadcast %cst_61 : f32 to vector<1x64xf32>
      %113 = arith.subf %112, %81 : vector<1x64xf32>
      %cst_62 = arith.constant -7.500000e-01 : f32
      %114 = vector.broadcast %cst_62 : f32 to vector<1x64xf32>
      %115 = arith.mulf %114, %113 : vector<1x64xf32>
      %cst_63 = arith.constant -3.750000e+00 : f32
      %116 = vector.broadcast %cst_63 : f32 to vector<1x64xf32>
      %117 = arith.subf %115, %116 : vector<1x64xf32>
      %118 = arith.mulf %117, %113 : vector<1x64xf32>
      %cst_64 = arith.constant -6.000000e+00 : f32
      %119 = vector.broadcast %cst_64 : f32 to vector<1x64xf32>
      %120 = arith.addf %118, %119 : vector<1x64xf32>
      %121 = arith.mulf %120, %113 : vector<1x64xf32>
      %cst_65 = arith.constant -3.000000e+00 : f32
      %122 = vector.broadcast %cst_65 : f32 to vector<1x64xf32>
      %123 = arith.subf %121, %122 : vector<1x64xf32>
      %124 = arith.subf %78, %80 : vector<1x64xf32>
      %cst_66 = arith.constant 1.000000e+00 : f32
      %125 = vector.broadcast %cst_66 : f32 to vector<1x64xf32>
      %126 = arith.addf %124, %125 : vector<1x64xf32>
      %cst_67 = arith.constant -7.500000e-01 : f32
      %127 = vector.broadcast %cst_67 : f32 to vector<1x64xf32>
      %128 = arith.mulf %127, %126 : vector<1x64xf32>
      %cst_68 = arith.constant -3.750000e+00 : f32
      %129 = vector.broadcast %cst_68 : f32 to vector<1x64xf32>
      %130 = arith.subf %128, %129 : vector<1x64xf32>
      %131 = arith.mulf %130, %126 : vector<1x64xf32>
      %cst_69 = arith.constant -6.000000e+00 : f32
      %132 = vector.broadcast %cst_69 : f32 to vector<1x64xf32>
      %133 = arith.addf %131, %132 : vector<1x64xf32>
      %134 = arith.mulf %133, %126 : vector<1x64xf32>
      %cst_70 = arith.constant -3.000000e+00 : f32
      %135 = vector.broadcast %cst_70 : f32 to vector<1x64xf32>
      %136 = arith.subf %134, %135 : vector<1x64xf32>
      %cst_71 = arith.constant 1.250000e+00 : f32
      %137 = vector.broadcast %cst_71 : f32 to vector<1x64xf32>
      %138 = arith.mulf %137, %124 : vector<1x64xf32>
      %cst_72 = arith.constant 2.250000e+00 : f32
      %139 = vector.broadcast %cst_72 : f32 to vector<1x64xf32>
      %140 = arith.subf %138, %139 : vector<1x64xf32>
      %141 = arith.mulf %140, %124 : vector<1x64xf32>
      %142 = arith.mulf %141, %124 : vector<1x64xf32>
      %cst_73 = arith.constant 1.000000e+00 : f32
      %143 = vector.broadcast %cst_73 : f32 to vector<1x64xf32>
      %144 = arith.addf %142, %143 : vector<1x64xf32>
      %cst_74 = arith.constant 1.000000e+00 : f32
      %145 = vector.broadcast %cst_74 : f32 to vector<1x64xf32>
      %146 = arith.subf %145, %124 : vector<1x64xf32>
      %cst_75 = arith.constant 1.250000e+00 : f32
      %147 = vector.broadcast %cst_75 : f32 to vector<1x64xf32>
      %148 = arith.mulf %147, %146 : vector<1x64xf32>
      %cst_76 = arith.constant 2.250000e+00 : f32
      %149 = vector.broadcast %cst_76 : f32 to vector<1x64xf32>
      %150 = arith.subf %148, %149 : vector<1x64xf32>
      %151 = arith.mulf %150, %146 : vector<1x64xf32>
      %152 = arith.mulf %151, %146 : vector<1x64xf32>
      %cst_77 = arith.constant 1.000000e+00 : f32
      %153 = vector.broadcast %cst_77 : f32 to vector<1x64xf32>
      %154 = arith.addf %152, %153 : vector<1x64xf32>
      %cst_78 = arith.constant 2.000000e+00 : f32
      %155 = vector.broadcast %cst_78 : f32 to vector<1x64xf32>
      %156 = arith.subf %155, %124 : vector<1x64xf32>
      %cst_79 = arith.constant -7.500000e-01 : f32
      %157 = vector.broadcast %cst_79 : f32 to vector<1x64xf32>
      %158 = arith.mulf %157, %156 : vector<1x64xf32>
      %cst_80 = arith.constant -3.750000e+00 : f32
      %159 = vector.broadcast %cst_80 : f32 to vector<1x64xf32>
      %160 = arith.subf %158, %159 : vector<1x64xf32>
      %161 = arith.mulf %160, %156 : vector<1x64xf32>
      %cst_81 = arith.constant -6.000000e+00 : f32
      %162 = vector.broadcast %cst_81 : f32 to vector<1x64xf32>
      %163 = arith.addf %161, %162 : vector<1x64xf32>
      %164 = arith.mulf %163, %156 : vector<1x64xf32>
      %cst_82 = arith.constant -3.000000e+00 : f32
      %165 = vector.broadcast %cst_82 : f32 to vector<1x64xf32>
      %166 = arith.subf %164, %165 : vector<1x64xf32>
      %167 = vector.broadcast %79 : vector<1x64xf32> to vector<256x64xf32>
      %168 = arith.subf %62, %167 : vector<256x64xf32>
      %169 = vector.broadcast %80 : vector<1x64xf32> to vector<256x64xf32>
      %170 = arith.subf %59, %169 : vector<256x64xf32>
      %cst_83 = arith.constant -1.000000e+00 : f32
      %171 = vector.broadcast %cst_83 : f32 to vector<256x64xf32>
      %172 = arith.cmpf oeq, %168, %171 : vector<256x64xf32>
      %cst_84 = arith.constant 0.000000e+00 : f32
      %173 = vector.shape_cast %93 : vector<1x64xf32> to vector<1x64xf32>
      %174 = vector.broadcast %173 : vector<1x64xf32> to vector<256x64xf32>
      %175 = vector.broadcast %cst_84 : f32 to vector<256x64xf32>
      %176 = arith.select %172, %174, %175 : vector<256x64xi1>, vector<256x64xf32>
      %cst_85 = arith.constant 0.000000e+00 : f32
      %177 = vector.broadcast %cst_85 : f32 to vector<256x64xf32>
      %178 = arith.cmpf oeq, %168, %177 : vector<256x64xf32>
      %cst_86 = arith.constant 0.000000e+00 : f32
      %179 = vector.shape_cast %101 : vector<1x64xf32> to vector<1x64xf32>
      %180 = vector.broadcast %179 : vector<1x64xf32> to vector<256x64xf32>
      %181 = vector.broadcast %cst_86 : f32 to vector<256x64xf32>
      %182 = arith.select %178, %180, %181 : vector<256x64xi1>, vector<256x64xf32>
      %183 = arith.addf %176, %182 : vector<256x64xf32>
      %cst_87 = arith.constant 1.000000e+00 : f32
      %184 = vector.broadcast %cst_87 : f32 to vector<256x64xf32>
      %185 = arith.cmpf oeq, %168, %184 : vector<256x64xf32>
      %cst_88 = arith.constant 0.000000e+00 : f32
      %186 = vector.shape_cast %111 : vector<1x64xf32> to vector<1x64xf32>
      %187 = vector.broadcast %186 : vector<1x64xf32> to vector<256x64xf32>
      %188 = vector.broadcast %cst_88 : f32 to vector<256x64xf32>
      %189 = arith.select %185, %187, %188 : vector<256x64xi1>, vector<256x64xf32>
      %190 = arith.addf %183, %189 : vector<256x64xf32>
      %cst_89 = arith.constant 2.000000e+00 : f32
      %191 = vector.broadcast %cst_89 : f32 to vector<256x64xf32>
      %192 = arith.cmpf oeq, %168, %191 : vector<256x64xf32>
      %cst_90 = arith.constant 0.000000e+00 : f32
      %193 = vector.shape_cast %123 : vector<1x64xf32> to vector<1x64xf32>
      %194 = vector.broadcast %193 : vector<1x64xf32> to vector<256x64xf32>
      %195 = vector.broadcast %cst_90 : f32 to vector<256x64xf32>
      %196 = arith.select %192, %194, %195 : vector<256x64xi1>, vector<256x64xf32>
      %197 = arith.addf %190, %196 : vector<256x64xf32>
      %cst_91 = arith.constant -1.000000e+00 : f32
      %198 = vector.broadcast %cst_91 : f32 to vector<256x64xf32>
      %199 = arith.cmpf oeq, %170, %198 : vector<256x64xf32>
      %cst_92 = arith.constant 0.000000e+00 : f32
      %200 = vector.shape_cast %136 : vector<1x64xf32> to vector<1x64xf32>
      %201 = vector.broadcast %200 : vector<1x64xf32> to vector<256x64xf32>
      %202 = vector.broadcast %cst_92 : f32 to vector<256x64xf32>
      %203 = arith.select %199, %201, %202 : vector<256x64xi1>, vector<256x64xf32>
      %cst_93 = arith.constant 0.000000e+00 : f32
      %204 = vector.broadcast %cst_93 : f32 to vector<256x64xf32>
      %205 = arith.cmpf oeq, %170, %204 : vector<256x64xf32>
      %cst_94 = arith.constant 0.000000e+00 : f32
      %206 = vector.shape_cast %144 : vector<1x64xf32> to vector<1x64xf32>
      %207 = vector.broadcast %206 : vector<1x64xf32> to vector<256x64xf32>
      %208 = vector.broadcast %cst_94 : f32 to vector<256x64xf32>
      %209 = arith.select %205, %207, %208 : vector<256x64xi1>, vector<256x64xf32>
      %210 = arith.addf %203, %209 : vector<256x64xf32>
      %cst_95 = arith.constant 1.000000e+00 : f32
      %211 = vector.broadcast %cst_95 : f32 to vector<256x64xf32>
      %212 = arith.cmpf oeq, %170, %211 : vector<256x64xf32>
      %cst_96 = arith.constant 0.000000e+00 : f32
      %213 = vector.shape_cast %154 : vector<1x64xf32> to vector<1x64xf32>
      %214 = vector.broadcast %213 : vector<1x64xf32> to vector<256x64xf32>
      %215 = vector.broadcast %cst_96 : f32 to vector<256x64xf32>
      %216 = arith.select %212, %214, %215 : vector<256x64xi1>, vector<256x64xf32>
      %217 = arith.addf %210, %216 : vector<256x64xf32>
      %cst_97 = arith.constant 2.000000e+00 : f32
      %218 = vector.broadcast %cst_97 : f32 to vector<256x64xf32>
      %219 = arith.cmpf oeq, %170, %218 : vector<256x64xf32>
      %cst_98 = arith.constant 0.000000e+00 : f32
      %220 = vector.shape_cast %166 : vector<1x64xf32> to vector<1x64xf32>
      %221 = vector.broadcast %220 : vector<1x64xf32> to vector<256x64xf32>
      %222 = vector.broadcast %cst_98 : f32 to vector<256x64xf32>
      %223 = arith.select %219, %221, %222 : vector<256x64xi1>, vector<256x64xf32>
      %224 = arith.addf %217, %223 : vector<256x64xf32>
      %225 = arith.mulf %197, %224 : vector<256x64xf32>
      %226 = arith.index_cast %37 : i32 to index
      %c0_99 = arith.constant 0 : index
      %c0_100 = arith.constant 0 : index
      %227 = vector.load %arg2[%226, %c0_99, %c0_100] : memref<8x4x256xf32, #tpu.memory_space<vmem>>, vector<1x4x256xf32>
      %228 = vector.shape_cast %227 : vector<1x4x256xf32> to vector<4x256xf32>
      %cst_101 = arith.constant dense<0.000000e+00> : vector<4x64xf32>
      %229 = tpu.matmul %228, %225, %cst_101 {dimension_numbers = #tpu.dot_dimension_numbers<[1], [0], [0], [1], [0, 0, 1, 1], [], []>} : vector<4x256xf32>, vector<256x64xf32>, vector<4x64xf32> -> vector<4x64xf32>
      %230 = arith.index_cast %37 : i32 to index
      %c0_102 = arith.constant 0 : index
      %c0_103 = arith.constant 0 : index
      %231 = vector.load %arg6[%230, %c0_102, %c0_103] : memref<8x4x64xf32, #tpu.memory_space<vmem>>, vector<1x4x64xf32>
      %232 = vector.shape_cast %231 : vector<1x4x64xf32> to vector<4x64xf32>
      %233 = vector.shape_cast %229 : vector<4x64xf32> to vector<1x4x64xf32>
      tpu.vector_store %arg6[%230, %c0_102, %c0_103], %233 {strides = array<i32>} : memref<8x4x64xf32, #tpu.memory_space<vmem>>, vector<1x4x64xf32>,
    }
    %c0 = arith.constant 0 : index
    %c0_8 = arith.constant 0 : index
    %10 = vector.load %arg3[%c0, %c0_8] : memref<8x32xf32, #tpu.memory_space<vmem>>, vector<8x32xf32>
    %c0_9 = arith.constant 0 : index
    %c0_10 = arith.constant 0 : index
    %c0_11 = arith.constant 0 : index
    %11 = vector.load %arg6[%c0_9, %c0_10, %c0_11] : memref<8x4x64xf32, #tpu.memory_space<vmem>>, vector<8x1x64xf32>
    %12 = vector.shape_cast %11 : vector<8x1x64xf32> to vector<8x64xf32>
    %c0_12 = arith.constant 0 : index
    %c0_13 = arith.constant 0 : index
    %c0_14 = arith.constant 0 : index
    %13 = vector.load %arg4[%c0_12, %c0_13, %c0_14] : memref<4x64x32xf32, #tpu.memory_space<vmem>>, vector<1x64x32xf32>
    %14 = vector.shape_cast %13 : vector<1x64x32xf32> to vector<64x32xf32>
    %cst = arith.constant dense<0.000000e+00> : vector<8x32xf32>
    %15 = tpu.matmul %12, %14, %cst {dimension_numbers = #tpu.dot_dimension_numbers<[1], [0], [0], [1], [0, 0, 1, 1], [], []>} : vector<8x64xf32>, vector<64x32xf32>, vector<8x32xf32> -> vector<8x32xf32>
    %16 = arith.addf %10, %15 : vector<8x32xf32>
    %c0_15 = arith.constant 0 : index
    %c1 = arith.constant 1 : index
    %c0_16 = arith.constant 0 : index
    %17 = vector.load %arg6[%c0_15, %c1, %c0_16] : memref<8x4x64xf32, #tpu.memory_space<vmem>>, vector<8x1x64xf32>
    %18 = vector.shape_cast %17 : vector<8x1x64xf32> to vector<8x64xf32>
    %c1_17 = arith.constant 1 : index
    %c0_18 = arith.constant 0 : index
    %c0_19 = arith.constant 0 : index
    %19 = vector.load %arg4[%c1_17, %c0_18, %c0_19] : memref<4x64x32xf32, #tpu.memory_space<vmem>>, vector<1x64x32xf32>
    %20 = vector.shape_cast %19 : vector<1x64x32xf32> to vector<64x32xf32>
    %cst_20 = arith.constant dense<0.000000e+00> : vector<8x32xf32>
    %21 = tpu.matmul %18, %20, %cst_20 {dimension_numbers = #tpu.dot_dimension_numbers<[1], [0], [0], [1], [0, 0, 1, 1], [], []>} : vector<8x64xf32>, vector<64x32xf32>, vector<8x32xf32> -> vector<8x32xf32>
    %22 = arith.addf %16, %21 : vector<8x32xf32>
    %c0_21 = arith.constant 0 : index
    %c2 = arith.constant 2 : index
    %c0_22 = arith.constant 0 : index
    %23 = vector.load %arg6[%c0_21, %c2, %c0_22] : memref<8x4x64xf32, #tpu.memory_space<vmem>>, vector<8x1x64xf32>
    %24 = vector.shape_cast %23 : vector<8x1x64xf32> to vector<8x64xf32>
    %c2_23 = arith.constant 2 : index
    %c0_24 = arith.constant 0 : index
    %c0_25 = arith.constant 0 : index
    %25 = vector.load %arg4[%c2_23, %c0_24, %c0_25] : memref<4x64x32xf32, #tpu.memory_space<vmem>>, vector<1x64x32xf32>
    %26 = vector.shape_cast %25 : vector<1x64x32xf32> to vector<64x32xf32>
    %cst_26 = arith.constant dense<0.000000e+00> : vector<8x32xf32>
    %27 = tpu.matmul %24, %26, %cst_26 {dimension_numbers = #tpu.dot_dimension_numbers<[1], [0], [0], [1], [0, 0, 1, 1], [], []>} : vector<8x64xf32>, vector<64x32xf32>, vector<8x32xf32> -> vector<8x32xf32>
    %28 = arith.addf %22, %27 : vector<8x32xf32>
    %c0_27 = arith.constant 0 : index
    %c3 = arith.constant 3 : index
    %c0_28 = arith.constant 0 : index
    %29 = vector.load %arg6[%c0_27, %c3, %c0_28] : memref<8x4x64xf32, #tpu.memory_space<vmem>>, vector<8x1x64xf32>
    %30 = vector.shape_cast %29 : vector<8x1x64xf32> to vector<8x64xf32>
    %c3_29 = arith.constant 3 : index
    %c0_30 = arith.constant 0 : index
    %c0_31 = arith.constant 0 : index
    %31 = vector.load %arg4[%c3_29, %c0_30, %c0_31] : memref<4x64x32xf32, #tpu.memory_space<vmem>>, vector<1x64x32xf32>
    %32 = vector.shape_cast %31 : vector<1x64x32xf32> to vector<64x32xf32>
    %cst_32 = arith.constant dense<0.000000e+00> : vector<8x32xf32>
    %33 = tpu.matmul %30, %32, %cst_32 {dimension_numbers = #tpu.dot_dimension_numbers<[1], [0], [0], [1], [0, 0, 1, 1], [], []>} : vector<8x64xf32>, vector<64x32xf32>, vector<8x32xf32> -> vector<8x32xf32>
    %34 = arith.addf %28, %33 : vector<8x32xf32>
    %c0_33 = arith.constant 0 : index
    %c0_34 = arith.constant 0 : index
    %35 = vector.load %arg5[%c0_33, %c0_34] : memref<8x32xf32, #tpu.memory_space<vmem>>, vector<8x32xf32>
    tpu.vector_store %arg5[%c0_33, %c0_34], %34 {strides = array<i32>} : memref<8x32xf32, #tpu.memory_space<vmem>>, vector<8x32xf32>,
    return
  }
  func.func @transform_0(%arg0: i32) -> i32 {
    %c0_i32 = arith.constant 0 : i32
    %c0_i32_0 = arith.constant 0 : i32
    return %c0_i32 : i32
  }
  func.func @transform_1(%arg0: i32) -> (i32, i32, i32) {
    %c0_i32 = arith.constant 0 : i32
    %c0_i32_0 = arith.constant 0 : i32
    %c0_i32_1 = arith.constant 0 : i32
    return %arg0, %c0_i32, %c0_i32_0 : i32, i32, i32
  }
  func.func @transform_2(%arg0: i32) -> (i32, i32) {
    %c0_i32 = arith.constant 0 : i32
    %c0_i32_0 = arith.constant 0 : i32
    return %arg0, %c0_i32 : i32, i32
  }
  func.func @transform_3(%arg0: i32) -> (i32, i32, i32) {
    %c0_i32 = arith.constant 0 : i32
    %c0_i32_0 = arith.constant 0 : i32
    %c0_i32_1 = arith.constant 0 : i32
    %c0_i32_2 = arith.constant 0 : i32
    return %c0_i32, %c0_i32_0, %c0_i32_1 : i32, i32, i32
  }
  func.func @transform_4(%arg0: i32) -> (i32, i32) {
    %c0_i32 = arith.constant 0 : i32
    %c0_i32_0 = arith.constant 0 : i32
    return %arg0, %c0_i32 : i32, i32
  }
}

</mosaic_0001>

<llo_original>
// kernel: tpu_custom_call.1
$region0: #{tpu_custom_call.1}
  #allocation0 [shape = 'u32[]', space=smem, size = 0x4, offset = 0x4, fixed_abs, tag = 'smem constant byte address 0x4 - core index']
  #allocation1 [shape = 'u32[144,128]{1,0:T(1,128)}', space=vmem, size = 0x12000, scoped, tag = 'internal scratch']
  #allocation2 [shape = 'f32[8,4,64]{2,1,0:T(4,128)}', space=vmem, size = 0x4000, scoped, tag = 'scratch operand']
  %s0 = inlined_call_operand.vmem [shape: f32[16], index: 0, kind: input, shape index: {}]
  %s1 = inlined_call_operand.vmem [shape: f32[8,4,256], index: 1, kind: input, shape index: {}]
  %s2 = inlined_call_operand.vmem [shape: f32[8,32], index: 2, kind: input, shape index: {}]
  %s3 = inlined_call_operand.vmem [shape: f32[4,64,32], index: 3, kind: input, shape index: {}]
  %s4 = inlined_call_operand.hbm [shape: f32[8,32], index: 4, kind: output, shape index: {}]
  %s5 = sld [smem:[#allocation0]]
  $region37: #{tpu_custom_call.1} parent=0
    _
  %s7 = ssub.s32 1, %s5
  %s8 = scalar_select 0, %s7, %s5
  $region1: #{tpu_custom_call.1} parent=0
    #allocation3 [shape = 'u8[512]{0}', space=smem, size = 0x200, scoped, tag = 'input window, operand 0, single buffered']
    #allocation4 [shape = 's32[1]{0}', space=sflag, size = 0x4, scoped, tag = 'scoped memory for tpu_custom_call.1']
    #allocation5 [shape = 's32[1]{0}', space=sflag, size = 0x4, scoped, tag = 'scoped memory for tpu_custom_call.1']
    #allocation6 [shape = 'u8[4096]{0}', space=vmem, size = 0x1000, scoped, tag = 'output window, operand 0, single buffered']
    %9 = vsyncpa [#allocation5], 0
    %10 = vsyncpa [#allocation4], 0
    // Predicated region
    $region2: #{tpu_custom_call.1} parent=1 // pred_check
      _
    $region3: #{tpu_custom_call.1} parent=1 // pred_check_branch
      %12 = sbr.rel (0) target = $region5
    $region4: #{tpu_custom_call.1} parent=1 // pred_region
      %s14 = ssub.s32 16, 16
      %15 = vsyncadd [#allocation5], %s14
      %s17 = sshll.u32 %s0, 4
      %s18 = int_to_ptr.vmem [resolvable:$true] %s17
      %20 = dma.vmem_to_smem %s18, 16, [#allocation3], [#allocation5]
    $region5: #{tpu_custom_call.1} parent=1 // pred_fallthru
      _
    // Predicated region
    $region6: #{tpu_custom_call.1} parent=1 // pred_check
      _
    $region7: #{tpu_custom_call.1} parent=1 // pred_check_branch
      %22 = sbr.rel (0) target = $region9
    $region8: #{tpu_custom_call.1} parent=1 // pred_region
      _
    $region9: #{tpu_custom_call.1} parent=1 // pred_fallthru
      _
    // Predicated region
    $region10: #{tpu_custom_call.1} parent=1 // pred_check
      _
    $region11: #{tpu_custom_call.1} parent=1 // pred_check_branch
      %24 = sbr.rel (0) target = $region13
    $region12: #{tpu_custom_call.1} parent=1 // pred_region
      _
    $region13: #{tpu_custom_call.1} parent=1 // pred_fallthru
      _
    // Predicated region
    $region14: #{tpu_custom_call.1} parent=1 // pred_check
      _
    $region15: #{tpu_custom_call.1} parent=1 // pred_check_branch
      %26 = sbr.rel (0) target = $region17
    $region16: #{tpu_custom_call.1} parent=1 // pred_region
      _
    $region17: #{tpu_custom_call.1} parent=1 // pred_fallthru
      _
    // Predicated region
    $region18: #{tpu_custom_call.1} parent=1 // pred_check
      _
    $region19: #{tpu_custom_call.1} parent=1 // pred_check_branch
      %28 = sbr.rel (0) target = $region21
    $region20: #{tpu_custom_call.1} parent=1 // pred_region
      %29 = dma.done [#allocation5], 16
    $region21: #{tpu_custom_call.1} parent=1 // pred_fallthru
      _
    %30 = sfence
    %s31 = smul.u32 0, 8
    %s32 = ssub.s32 2, %s31
    %p33 = scmp.gt.s32.totalorder %s32, 0
    %s34 = scalar_select %p33, %s32, 0
    %p35 = scmp.lt.s32.totalorder %s34, 8
    %s36 = scalar_select %p35, %s34, 8
    // While loop
    $region22: #{tpu_custom_call.1} parent=1 // loop_pre_header
      _
    $region23: #{tpu_custom_call.1} parent=1 // loop_header
      %s38 = sphi 0, %s40
      %p39 = scmp.ge.s32.totalorder %s38, %s36
    $region24: #{tpu_custom_call.1} parent=1 // loop_header_branch
      %42 = sbr.rel (%p39) target = $region28
    $region25: #{tpu_custom_call.1} parent=1 // loop_body
      %s43 = sadd.s32 %s31, %s38
      %s44 = smul.u32 %s43, 2
      %s45 = sld [smem:[#allocation3 + %s44]]
      %s46 = sadd.s32 %s44, 1
      %s47 = sld [smem:[#allocation3 + %s46]]
      %v48 = vlaneseq
      %v49 = vand.u32 %v48, 127
      %v50 = vcvt.s32.f32 %v49
      %v51 = vrcp.pop 8.0
      %v52 = vmul.f32 %v50, %v51
      %v53 = vfloor.f32 %v52
      %v54 = vmul.f32 %v53, 8.0
      %v55 = vsub.f32 %v50, %v54
      %v56 = vlaneseq
      %v57 = vshrl.u32 %v56, 7
      %v58 = vadd.s32 %v57, 8
      %v59 = vadd.s32 %v57, 16
      %v60 = vadd.s32 %v57, 24
      %v61 = vadd.s32 %v57, 32
      %v62 = vadd.s32 %v57, 40
      %v63 = vadd.s32 %v57, 48
      %v64 = vadd.s32 %v57, 56
      %v65 = vadd.s32 %v57, 64
      %v66 = vadd.s32 %v57, 72
      %v67 = vadd.s32 %v57, 80
      %v68 = vadd.s32 %v57, 88
      %v69 = vadd.s32 %v57, 96
      %v70 = vadd.s32 %v57, 104
      %v71 = vadd.s32 %v57, 112
      %v72 = vadd.s32 %v57, 120
      %v73 = vadd.s32 %v57, 128
      %v74 = vadd.s32 %v57, 136
      %v75 = vadd.s32 %v57, 144
      %v76 = vadd.s32 %v57, 152
      %v77 = vadd.s32 %v57, 160
      %v78 = vadd.s32 %v57, 168
      %v79 = vadd.s32 %v57, 176
      %v80 = vadd.s32 %v57, 184
      %v81 = vadd.s32 %v57, 192
      %v82 = vadd.s32 %v57, 200
      %v83 = vadd.s32 %v57, 208
      %v84 = vadd.s32 %v57, 216
      %v85 = vadd.s32 %v57, 224
      %v86 = vadd.s32 %v57, 232
      %v87 = vadd.s32 %v57, 240
      %v88 = vadd.s32 %v57, 248
      %v89 = vcvt.s32.f32 %v57
      %v90 = vcvt.s32.f32 %v58
      %v91 = vcvt.s32.f32 %v59
      %v92 = vcvt.s32.f32 %v60
      %v93 = vcvt.s32.f32 %v61
      %v94 = vcvt.s32.f32 %v62
      %v95 = vcvt.s32.f32 %v63
      %v96 = vcvt.s32.f32 %v64
      %v97 = vcvt.s32.f32 %v65
      %v98 = vcvt.s32.f32 %v66
      %v99 = vcvt.s32.f32 %v67
      %v100 = vcvt.s32.f32 %v68
      %v101 = vcvt.s32.f32 %v69
      %v102 = vcvt.s32.f32 %v70
      %v103 = vcvt.s32.f32 %v71
      %v104 = vcvt.s32.f32 %v72
      %v105 = vcvt.s32.f32 %v73
      %v106 = vcvt.s32.f32 %v74
      %v107 = vcvt.s32.f32 %v75
      %v108 = vcvt.s32.f32 %v76
      %v109 = vcvt.s32.f32 %v77
      %v110 = vcvt.s32.f32 %v78
      %v111 = vcvt.s32.f32 %v79
      %v112 = vcvt.s32.f32 %v80
      %v113 = vcvt.s32.f32 %v81
      %v114 = vcvt.s32.f32 %v82
      %v115 = vcvt.s32.f32 %v83
      %v116 = vcvt.s32.f32 %v84
      %v117 = vcvt.s32.f32 %v85
      %v118 = vcvt.s32.f32 %v86
      %v119 = vcvt.s32.f32 %v87
      %v120 = vcvt.s32.f32 %v88
      %v121 = vrcp.pop 16.0
      %v122 = vmul.f32 %v89, %v121
      %v123 = vmul.f32 %v90, %v121
      %v124 = vmul.f32 %v91, %v121
      %v125 = vmul.f32 %v92, %v121
      %v126 = vmul.f32 %v93, %v121
      %v127 = vmul.f32 %v94, %v121
      %v128 = vmul.f32 %v95, %v121
      %v129 = vmul.f32 %v96, %v121
      %v130 = vmul.f32 %v97, %v121
      %v131 = vmul.f32 %v98, %v121
      %v132 = vmul.f32 %v99, %v121
      %v133 = vmul.f32 %v100, %v121
      %v134 = vmul.f32 %v101, %v121
      %v135 = vmul.f32 %v102, %v121
      %v136 = vmul.f32 %v103, %v121
      %v137 = vmul.f32 %v104, %v121
      %v138 = vmul.f32 %v105, %v121
      %v139 = vmul.f32 %v106, %v121
      %v140 = vmul.f32 %v107, %v121
      %v141 = vmul.f32 %v108, %v121
      %v142 = vmul.f32 %v109, %v121
      %v143 = vmul.f32 %v110, %v121
      %v144 = vmul.f32 %v111, %v121
      %v145 = vmul.f32 %v112, %v121
      %v146 = vmul.f32 %v113, %v121
      %v147 = vmul.f32 %v114, %v121
      %v148 = vmul.f32 %v115, %v121
      %v149 = vmul.f32 %v116, %v121
      %v150 = vmul.f32 %v117, %v121
      %v151 = vmul.f32 %v118, %v121
      %v152 = vmul.f32 %v119, %v121
      %v153 = vmul.f32 %v120, %v121
      %v154 = vfloor.f32 %v122
      %v155 = vfloor.f32 %v123
      %v156 = vfloor.f32 %v124
      %v157 = vfloor.f32 %v125
      %v158 = vfloor.f32 %v126
      %v159 = vfloor.f32 %v127
      %v160 = vfloor.f32 %v128
      %v161 = vfloor.f32 %v129
      %v162 = vfloor.f32 %v130
      %v163 = vfloor.f32 %v131
      %v164 = vfloor.f32 %v132
      %v165 = vfloor.f32 %v133
      %v166 = vfloor.f32 %v134
      %v167 = vfloor.f32 %v135
      %v168 = vfloor.f32 %v136
      %v169 = vfloor.f32 %v137
      %v170 = vfloor.f32 %v138
      %v171 = vfloor.f32 %v139
      %v172 = vfloor.f32 %v140
      %v173 = vfloor.f32 %v141
      %v174 = vfloor.f32 %v142
      %v175 = vfloor.f32 %v143
      %v176 = vfloor.f32 %v144
      %v177 = vfloor.f32 %v145
      %v178 = vfloor.f32 %v146
      %v179 = vfloor.f32 %v147
      %v180 = vfloor.f32 %v148
      %v181 = vfloor.f32 %v149
      %v182 = vfloor.f32 %v150
      %v183 = vfloor.f32 %v151
      %v184 = vfloor.f32 %v152
      %v185 = vfloor.f32 %v153
      %v186 = vmul.f32 %v154, 16.0
      %v187 = vmul.f32 %v155, 16.0
      %v188 = vmul.f32 %v156, 16.0
      %v189 = vmul.f32 %v157, 16.0
      %v190 = vmul.f32 %v158, 16.0
      %v191 = vmul.f32 %v159, 16.0
      %v192 = vmul.f32 %v160, 16.0
      %v193 = vmul.f32 %v161, 16.0
      %v194 = vmul.f32 %v162, 16.0
      %v195 = vmul.f32 %v163, 16.0
      %v196 = vmul.f32 %v164, 16.0
      %v197 = vmul.f32 %v165, 16.0
      %v198 = vmul.f32 %v166, 16.0
      %v199 = vmul.f32 %v167, 16.0
      %v200 = vmul.f32 %v168, 16.0
      %v201 = vmul.f32 %v169, 16.0
      %v202 = vmul.f32 %v170, 16.0
      %v203 = vmul.f32 %v171, 16.0
      %v204 = vmul.f32 %v172, 16.0
      %v205 = vmul.f32 %v173, 16.0
      %v206 = vmul.f32 %v174, 16.0
      %v207 = vmul.f32 %v175, 16.0
      %v208 = vmul.f32 %v176, 16.0
      %v209 = vmul.f32 %v177, 16.0
      %v210 = vmul.f32 %v178, 16.0
      %v211 = vmul.f32 %v179, 16.0
      %v212 = vmul.f32 %v180, 16.0
      %v213 = vmul.f32 %v181, 16.0
      %v214 = vmul.f32 %v182, 16.0
      %v215 = vmul.f32 %v183, 16.0
      %v216 = vmul.f32 %v184, 16.0
      %v217 = vmul.f32 %v185, 16.0
      %v218 = vsub.f32 %v89, %v186
      %v219 = vsub.f32 %v90, %v187
      %v220 = vsub.f32 %v91, %v188
      %v221 = vsub.f32 %v92, %v189
      %v222 = vsub.f32 %v93, %v190
      %v223 = vsub.f32 %v94, %v191
      %v224 = vsub.f32 %v95, %v192
      %v225 = vsub.f32 %v96, %v193
      %v226 = vsub.f32 %v97, %v194
      %v227 = vsub.f32 %v98, %v195
      %v228 = vsub.f32 %v99, %v196
      %v229 = vsub.f32 %v100, %v197
      %v230 = vsub.f32 %v101, %v198
      %v231 = vsub.f32 %v102, %v199
      %v232 = vsub.f32 %v103, %v200
      %v233 = vsub.f32 %v104, %v201
      %v234 = vsub.f32 %v105, %v202
      %v235 = vsub.f32 %v106, %v203
      %v236 = vsub.f32 %v107, %v204
      %v237 = vsub.f32 %v108, %v205
      %v238 = vsub.f32 %v109, %v206
      %v239 = vsub.f32 %v110, %v207
      %v240 = vsub.f32 %v111, %v208
      %v241 = vsub.f32 %v112, %v209
      %v242 = vsub.f32 %v113, %v210
      %v243 = vsub.f32 %v114, %v211
      %v244 = vsub.f32 %v115, %v212
      %v245 = vsub.f32 %v116, %v213
      %v246 = vsub.f32 %v117, %v214
      %v247 = vsub.f32 %v118, %v215
      %v248 = vsub.f32 %v119, %v216
      %v249 = vsub.f32 %v120, %v217
      %v250 = vmul.f32 %v55, 0.2857143
      %v251 = vstv %s45
      %v252 = vadd.f32 %v250, %v251
      %v253 = vmul.f32 %v252, 8.0
      %v254 = vsub.f32 %v253, 0.5
      %v255 = vmul.f32 %v53, 0.2857143
      %v256 = vstv %s47
      %v257 = vadd.f32 %v255, %v256
      %v258 = vmul.f32 %v257, 8.0
      %v259 = vsub.f32 %v258, 0.5
      %v260 = vfloor.f32 %v254
      %v261 = vfloor.f32 %v259
      %v262 = vsub.f32 %v254, %v260
      %v263 = vadd.f32 %v262, 1.0
      %v264 = vmul.f32 %v263, -0.75
      %v265 = vsub.f32 %v264, -3.75
      %v266 = vmul.f32 %v265, %v263
      %v267 = vadd.f32 %v266, -6.0
      %v268 = vmul.f32 %v267, %v263
      %v269 = vsub.f32 %v268, -3.0
      %v270 = vmul.f32 %v262, 1.25
      %v271 = vsub.f32 %v270, 2.25
      %v272 = vmul.f32 %v271, %v262
      %v273 = vmul.f32 %v272, %v262
      %v274 = vadd.f32 %v273, 1.0
      %v275 = vsub.f32 1.0, %v262
      %v276 = vmul.f32 %v275, 1.25
      %v277 = vsub.f32 %v276, 2.25
      %v278 = vmul.f32 %v277, %v275
      %v279 = vmul.f32 %v278, %v275
      %v280 = vadd.f32 %v279, 1.0
      %v281 = vsub.f32 2.0, %v262
      %v282 = vmul.f32 %v281, -0.75
      %v283 = vsub.f32 %v282, -3.75
      %v284 = vmul.f32 %v283, %v281
      %v285 = vadd.f32 %v284, -6.0
      %v286 = vmul.f32 %v285, %v281
      %v287 = vsub.f32 %v286, -3.0
      %v288 = vsub.f32 %v259, %v261
      %v289 = vadd.f32 %v288, 1.0
      %v290 = vmul.f32 %v289, -0.75
      %v291 = vsub.f32 %v290, -3.75
      %v292 = vmul.f32 %v291, %v289
      %v293 = vadd.f32 %v292, -6.0
      %v294 = vmul.f32 %v293, %v289
      %v295 = vsub.f32 %v294, -3.0
      %v296 = vmul.f32 %v288, 1.25
      %v297 = vsub.f32 %v296, 2.25
      %v298 = vmul.f32 %v297, %v288
      %v299 = vmul.f32 %v298, %v288
      %v300 = vadd.f32 %v299, 1.0
      %v301 = vsub.f32 1.0, %v288
      %v302 = vmul.f32 %v301, 1.25
      %v303 = vsub.f32 %v302, 2.25
      %v304 = vmul.f32 %v303, %v301
      %v305 = vmul.f32 %v304, %v301
      %v306 = vadd.f32 %v305, 1.0
      %v307 = vsub.f32 2.0, %v288
      %v308 = vmul.f32 %v307, -0.75
      %v309 = vsub.f32 %v308, -3.75
      %v310 = vmul.f32 %v309, %v307
      %v311 = vadd.f32 %v310, -6.0
      %v312 = vmul.f32 %v311, %v307
      %v313 = vsub.f32 %v312, -3.0
      %v314 = vsub.f32 %v218, %v260
      %v315 = vsub.f32 %v219, %v260
      %v316 = vsub.f32 %v220, %v260
      %v317 = vsub.f32 %v221, %v260
      %v318 = vsub.f32 %v222, %v260
      %v319 = vsub.f32 %v223, %v260
      %v320 = vsub.f32 %v224, %v260
      %v321 = vsub.f32 %v225, %v260
      %v322 = vsub.f32 %v226, %v260
      %v323 = vsub.f32 %v227, %v260
      %v324 = vsub.f32 %v228, %v260
      %v325 = vsub.f32 %v229, %v260
      %v326 = vsub.f32 %v230, %v260
      %v327 = vsub.f32 %v231, %v260
      %v328 = vsub.f32 %v232, %v260
      %v329 = vsub.f32 %v233, %v260
      %v330 = vsub.f32 %v234, %v260
      %v331 = vsub.f32 %v235, %v260
      %v332 = vsub.f32 %v236, %v260
      %v333 = vsub.f32 %v237, %v260
      %v334 = vsub.f32 %v238, %v260
      %v335 = vsub.f32 %v239, %v260
      %v336 = vsub.f32 %v240, %v260
      %v337 = vsub.f32 %v241, %v260
      %v338 = vsub.f32 %v242, %v260
      %v339 = vsub.f32 %v243, %v260
      %v340 = vsub.f32 %v244, %v260
      %v341 = vsub.f32 %v245, %v260
      %v342 = vsub.f32 %v246, %v260
      %v343 = vsub.f32 %v247, %v260
      %v344 = vsub.f32 %v248, %v260
      %v345 = vsub.f32 %v249, %v260
      %v346 = vsub.f32 %v154, %v261
      %v347 = vsub.f32 %v155, %v261
      %v348 = vsub.f32 %v156, %v261
      %v349 = vsub.f32 %v157, %v261
      %v350 = vsub.f32 %v158, %v261
      %v351 = vsub.f32 %v159, %v261
      %v352 = vsub.f32 %v160, %v261
      %v353 = vsub.f32 %v161, %v261
      %v354 = vsub.f32 %v162, %v261
      %v355 = vsub.f32 %v163, %v261
      %v356 = vsub.f32 %v164, %v261
      %v357 = vsub.f32 %v165, %v261
      %v358 = vsub.f32 %v166, %v261
      %v359 = vsub.f32 %v167, %v261
      %v360 = vsub.f32 %v168, %v261
      %v361 = vsub.f32 %v169, %v261
      %v362 = vsub.f32 %v170, %v261
      %v363 = vsub.f32 %v171, %v261
      %v364 = vsub.f32 %v172, %v261
      %v365 = vsub.f32 %v173, %v261
      %v366 = vsub.f32 %v174, %v261
      %v367 = vsub.f32 %v175, %v261
      %v368 = vsub.f32 %v176, %v261
      %v369 = vsub.f32 %v177, %v261
      %v370 = vsub.f32 %v178, %v261
      %v371 = vsub.f32 %v179, %v261
      %v372 = vsub.f32 %v180, %v261
      %v373 = vsub.f32 %v181, %v261
      %v374 = vsub.f32 %v182, %v261
      %v375 = vsub.f32 %v183, %v261
      %v376 = vsub.f32 %v184, %v261
      %v377 = vsub.f32 %v185, %v261
      %vm378 = vcmp.eq.f32.partialorder %v314, -1.0
      %vm379 = vcmp.eq.f32.partialorder %v315, -1.0
      %vm380 = vcmp.eq.f32.partialorder %v316, -1.0
      %vm381 = vcmp.eq.f32.partialorder %v317, -1.0
      %vm382 = vcmp.eq.f32.partialorder %v318, -1.0
      %vm383 = vcmp.eq.f32.partialorder %v319, -1.0
      %vm384 = vcmp.eq.f32.partialorder %v320, -1.0
      %vm385 = vcmp.eq.f32.partialorder %v321, -1.0
      %vm386 = vcmp.eq.f32.partialorder %v322, -1.0
      %vm387 = vcmp.eq.f32.partialorder %v323, -1.0
      %vm388 = vcmp.eq.f32.partialorder %v324, -1.0
      %vm389 = vcmp.eq.f32.partialorder %v325, -1.0
      %vm390 = vcmp.eq.f32.partialorder %v326, -1.0
      %vm391 = vcmp.eq.f32.partialorder %v327, -1.0
      %vm392 = vcmp.eq.f32.partialorder %v328, -1.0
      %vm393 = vcmp.eq.f32.partialorder %v329, -1.0
      %vm394 = vcmp.eq.f32.partialorder %v330, -1.0
      %vm395 = vcmp.eq.f32.partialorder %v331, -1.0
      %vm396 = vcmp.eq.f32.partialorder %v332, -1.0
      %vm397 = vcmp.eq.f32.partialorder %v333, -1.0
      %vm398 = vcmp.eq.f32.partialorder %v334, -1.0
      %vm399 = vcmp.eq.f32.partialorder %v335, -1.0
      %vm400 = vcmp.eq.f32.partialorder %v336, -1.0
      %vm401 = vcmp.eq.f32.partialorder %v337, -1.0
      %vm402 = vcmp.eq.f32.partialorder %v338, -1.0
      %vm403 = vcmp.eq.f32.partialorder %v339, -1.0
      %vm404 = vcmp.eq.f32.partialorder %v340, -1.0
      %vm405 = vcmp.eq.f32.partialorder %v341, -1.0
      %vm406 = vcmp.eq.f32.partialorder %v342, -1.0
      %vm407 = vcmp.eq.f32.partialorder %v343, -1.0
      %vm408 = vcmp.eq.f32.partialorder %v344, -1.0
      %vm409 = vcmp.eq.f32.partialorder %v345, -1.0
      %v410 = vsel %vm378, %v269, 0.0
      %v411 = vsel %vm379, %v269, 0.0
      %v412 = vsel %vm380, %v269, 0.0
      %v413 = vsel %vm381, %v269, 0.0
      %v414 = vsel %vm382, %v269, 0.0
      %v415 = vsel %vm383, %v269, 0.0
      %v416 = vsel %vm384, %v269, 0.0
      %v417 = vsel %vm385, %v269, 0.0
      %v418 = vsel %vm386, %v269, 0.0
      %v419 = vsel %vm387, %v269, 0.0
      %v420 = vsel %vm388, %v269, 0.0
      %v421 = vsel %vm389, %v269, 0.0
      %v422 = vsel %vm390, %v269, 0.0
      %v423 = vsel %vm391, %v269, 0.0
      %v424 = vsel %vm392, %v269, 0.0
      %v425 = vsel %vm393, %v269, 0.0
      %v426 = vsel %vm394, %v269, 0.0
      %v427 = vsel %vm395, %v269, 0.0
      %v428 = vsel %vm396, %v269, 0.0
      %v429 = vsel %vm397, %v269, 0.0
      %v430 = vsel %vm398, %v269, 0.0
      %v431 = vsel %vm399, %v269, 0.0
      %v432 = vsel %vm400, %v269, 0.0
      %v433 = vsel %vm401, %v269, 0.0
      %v434 = vsel %vm402, %v269, 0.0
      %v435 = vsel %vm403, %v269, 0.0
      %v436 = vsel %vm404, %v269, 0.0
      %v437 = vsel %vm405, %v269, 0.0
      %v438 = vsel %vm406, %v269, 0.0
      %v439 = vsel %vm407, %v269, 0.0
      %v440 = vsel %vm408, %v269, 0.0
      %v441 = vsel %vm409, %v269, 0.0
      %vm442 = vcmp.eq.f32.partialorder %v314, 0.0
      %vm443 = vcmp.eq.f32.partialorder %v315, 0.0
      %vm444 = vcmp.eq.f32.partialorder %v316, 0.0
      %vm445 = vcmp.eq.f32.partialorder %v317, 0.0
      %vm446 = vcmp.eq.f32.partialorder %v318, 0.0
      %vm447 = vcmp.eq.f32.partialorder %v319, 0.0
      %vm448 = vcmp.eq.f32.partialorder %v320, 0.0
      %vm449 = vcmp.eq.f32.partialorder %v321, 0.0
      %vm450 = vcmp.eq.f32.partialorder %v322, 0.0
      %vm451 = vcmp.eq.f32.partialorder %v323, 0.0
      %vm452 = vcmp.eq.f32.partialorder %v324, 0.0
      %vm453 = vcmp.eq.f32.partialorder %v325, 0.0
      %vm454 = vcmp.eq.f32.partialorder %v326, 0.0
      %vm455 = vcmp.eq.f32.partialorder %v327, 0.0
      %vm456 = vcmp.eq.f32.partialorder %v328, 0.0
      %vm457 = vcmp.eq.f32.partialorder %v329, 0.0
      %vm458 = vcmp.eq.f32.partialorder %v330, 0.0
      %vm459 = vcmp.eq.f32.partialorder %v331, 0.0
      %vm460 = vcmp.eq.f32.partialorder %v332, 0.0
      %vm461 = vcmp.eq.f32.partialorder %v333, 0.0
      %vm462 = vcmp.eq.f32.partialorder %v334, 0.0
      %vm463 = vcmp.eq.f32.partialorder %v335, 0.0
      %vm464 = vcmp.eq.f32.partialorder %v336, 0.0
      %vm465 = vcmp.eq.f32.partialorder %v337, 0.0
      %vm466 = vcmp.eq.f32.partialorder %v338, 0.0
      %vm467 = vcmp.eq.f32.partialorder %v339, 0.0
      %vm468 = vcmp.eq.f32.partialorder %v340, 0.0
      %vm469 = vcmp.eq.f32.partialorder %v341, 0.0
      %vm470 = vcmp.eq.f32.partialorder %v342, 0.0
      %vm471 = vcmp.eq.f32.partialorder %v343, 0.0
      %vm472 = vcmp.eq.f32.partialorder %v344, 0.0
      %vm473 = vcmp.eq.f32.partialorder %v345, 0.0
      %v474 = vsel %vm442, %v274, 0.0
      %v475 = vsel %vm443, %v274, 0.0
      %v476 = vsel %vm444, %v274, 0.0
      %v477 = vsel %vm445, %v274, 0.0
      %v478 = vsel %vm446, %v274, 0.0
      %v479 = vsel %vm447, %v274, 0.0
      %v480 = vsel %vm448, %v274, 0.0
      %v481 = vsel %vm449, %v274, 0.0
      %v482 = vsel %vm450, %v274, 0.0
      %v483 = vsel %vm451, %v274, 0.0
      %v484 = vsel %vm452, %v274, 0.0
      %v485 = vsel %vm453, %v274, 0.0
      %v486 = vsel %vm454, %v274, 0.0
      %v487 = vsel %vm455, %v274, 0.0
      %v488 = vsel %vm456, %v274, 0.0
      %v489 = vsel %vm457, %v274, 0.0
      %v490 = vsel %vm458, %v274, 0.0
      %v491 = vsel %vm459, %v274, 0.0
      %v492 = vsel %vm460, %v274, 0.0
      %v493 = vsel %vm461, %v274, 0.0
      %v494 = vsel %vm462, %v274, 0.0
      %v495 = vsel %vm463, %v274, 0.0
      %v496 = vsel %vm464, %v274, 0.0
      %v497 = vsel %vm465, %v274, 0.0
      %v498 = vsel %vm466, %v274, 0.0
      %v499 = vsel %vm467, %v274, 0.0
      %v500 = vsel %vm468, %v274, 0.0
      %v501 = vsel %vm469, %v274, 0.0
      %v502 = vsel %vm470, %v274, 0.0
      %v503 = vsel %vm471, %v274, 0.0
      %v504 = vsel %vm472, %v274, 0.0
      %v505 = vsel %vm473, %v274, 0.0
      %v506 = vadd.f32 %v410, %v474
      %v507 = vadd.f32 %v411, %v475
      %v508 = vadd.f32 %v412, %v476
      %v509 = vadd.f32 %v413, %v477
      %v510 = vadd.f32 %v414, %v478
      %v511 = vadd.f32 %v415, %v479
      %v512 = vadd.f32 %v416, %v480
      %v513 = vadd.f32 %v417, %v481
      %v514 = vadd.f32 %v418, %v482
      %v515 = vadd.f32 %v419, %v483
      %v516 = vadd.f32 %v420, %v484
      %v517 = vadd.f32 %v421, %v485
      %v518 = vadd.f32 %v422, %v486
      %v519 = vadd.f32 %v423, %v487
      %v520 = vadd.f32 %v424, %v488
      %v521 = vadd.f32 %v425, %v489
      %v522 = vadd.f32 %v426, %v490
      %v523 = vadd.f32 %v427, %v491
      %v524 = vadd.f32 %v428, %v492
      %v525 = vadd.f32 %v429, %v493
      %v526 = vadd.f32 %v430, %v494
      %v527 = vadd.f32 %v431, %v495
      %v528 = vadd.f32 %v432, %v496
      %v529 = vadd.f32 %v433, %v497
      %v530 = vadd.f32 %v434, %v498
      %v531 = vadd.f32 %v435, %v499
      %v532 = vadd.f32 %v436, %v500
      %v533 = vadd.f32 %v437, %v501
      %v534 = vadd.f32 %v438, %v502
      %v535 = vadd.f32 %v439, %v503
      %v536 = vadd.f32 %v440, %v504
      %v537 = vadd.f32 %v441, %v505
      %vm538 = vcmp.eq.f32.partialorder %v314, 1.0
      %vm539 = vcmp.eq.f32.partialorder %v315, 1.0
      %vm540 = vcmp.eq.f32.partialorder %v316, 1.0
      %vm541 = vcmp.eq.f32.partialorder %v317, 1.0
      %vm542 = vcmp.eq.f32.partialorder %v318, 1.0
      %vm543 = vcmp.eq.f32.partialorder %v319, 1.0
      %vm544 = vcmp.eq.f32.partialorder %v320, 1.0
      %vm545 = vcmp.eq.f32.partialorder %v321, 1.0
      %vm546 = vcmp.eq.f32.partialorder %v322, 1.0
      %vm547 = vcmp.eq.f32.partialorder %v323, 1.0
      %vm548 = vcmp.eq.f32.partialorder %v324, 1.0
      %vm549 = vcmp.eq.f32.partialorder %v325, 1.0
      %vm550 = vcmp.eq.f32.partialorder %v326, 1.0
      %vm551 = vcmp.eq.f32.partialorder %v327, 1.0
      %vm552 = vcmp.eq.f32.partialorder %v328, 1.0
      %vm553 = vcmp.eq.f32.partialorder %v329, 1.0
      %vm554 = vcmp.eq.f32.partialorder %v330, 1.0
      %vm555 = vcmp.eq.f32.partialorder %v331, 1.0
      %vm556 = vcmp.eq.f32.partialorder %v332, 1.0
      %vm557 = vcmp.eq.f32.partialorder %v333, 1.0
      %vm558 = vcmp.eq.f32.partialorder %v334, 1.0
      %vm559 = vcmp.eq.f32.partialorder %v335, 1.0
      %vm560 = vcmp.eq.f32.partialorder %v336, 1.0
      %vm561 = vcmp.eq.f32.partialorder %v337, 1.0
      %vm562 = vcmp.eq.f32.partialorder %v338, 1.0
      %vm563 = vcmp.eq.f32.partialorder %v339, 1.0
      %vm564 = vcmp.eq.f32.partialorder %v340, 1.0
      %vm565 = vcmp.eq.f32.partialorder %v341, 1.0
      %vm566 = vcmp.eq.f32.partialorder %v342, 1.0
      %vm567 = vcmp.eq.f32.partialorder %v343, 1.0
      %vm568 = vcmp.eq.f32.partialorder %v344, 1.0
      %vm569 = vcmp.eq.f32.partialorder %v345, 1.0
      %v570 = vsel %vm538, %v280, 0.0
      %v571 = vsel %vm539, %v280, 0.0
      %v572 = vsel %vm540, %v280, 0.0
      %v573 = vsel %vm541, %v280, 0.0
      %v574 = vsel %vm542, %v280, 0.0
      %v575 = vsel %vm543, %v280, 0.0
      %v576 = vsel %vm544, %v280, 0.0
      %v577 = vsel %vm545, %v280, 0.0
      %v578 = vsel %vm546, %v280, 0.0
      %v579 = vsel %vm547, %v280, 0.0
      %v580 = vsel %vm548, %v280, 0.0
      %v581 = vsel %vm549, %v280, 0.0
      %v582 = vsel %vm550, %v280, 0.0
      %v583 = vsel %vm551, %v280, 0.0
      %v584 = vsel %vm552, %v280, 0.0
      %v585 = vsel %vm553, %v280, 0.0
      %v586 = vsel %vm554, %v280, 0.0
      %v587 = vsel %vm555, %v280, 0.0
      %v588 = vsel %vm556, %v280, 0.0
      %v589 = vsel %vm557, %v280, 0.0
      %v590 = vsel %vm558, %v280, 0.0
      %v591 = vsel %vm559, %v280, 0.0
      %v592 = vsel %vm560, %v280, 0.0
      %v593 = vsel %vm561, %v280, 0.0
      %v594 = vsel %vm562, %v280, 0.0
      %v595 = vsel %vm563, %v280, 0.0
      %v596 = vsel %vm564, %v280, 0.0
      %v597 = vsel %vm565, %v280, 0.0
      %v598 = vsel %vm566, %v280, 0.0
      %v599 = vsel %vm567, %v280, 0.0
      %v600 = vsel %vm568, %v280, 0.0
      %v601 = vsel %vm569, %v280, 0.0
      %v602 = vadd.f32 %v506, %v570
      %v603 = vadd.f32 %v507, %v571
      %v604 = vadd.f32 %v508, %v572
      %v605 = vadd.f32 %v509, %v573
      %v606 = vadd.f32 %v510, %v574
      %v607 = vadd.f32 %v511, %v575
      %v608 = vadd.f32 %v512, %v576
      %v609 = vadd.f32 %v513, %v577
      %v610 = vadd.f32 %v514, %v578
      %v611 = vadd.f32 %v515, %v579
      %v612 = vadd.f32 %v516, %v580
      %v613 = vadd.f32 %v517, %v581
      %v614 = vadd.f32 %v518, %v582
      %v615 = vadd.f32 %v519, %v583
      %v616 = vadd.f32 %v520, %v584
      %v617 = vadd.f32 %v521, %v585
      %v618 = vadd.f32 %v522, %v586
      %v619 = vadd.f32 %v523, %v587
      %v620 = vadd.f32 %v524, %v588
      %v621 = vadd.f32 %v525, %v589
      %v622 = vadd.f32 %v526, %v590
      %v623 = vadd.f32 %v527, %v591
      %v624 = vadd.f32 %v528, %v592
      %v625 = vadd.f32 %v529, %v593
      %v626 = vadd.f32 %v530, %v594
      %v627 = vadd.f32 %v531, %v595
      %v628 = vadd.f32 %v532, %v596
      %v629 = vadd.f32 %v533, %v597
      %v630 = vadd.f32 %v534, %v598
      %v631 = vadd.f32 %v535, %v599
      %v632 = vadd.f32 %v536, %v600
      %v633 = vadd.f32 %v537, %v601
      %vm634 = vcmp.eq.f32.partialorder %v314, 2.0
      %vm635 = vcmp.eq.f32.partialorder %v315, 2.0
      %vm636 = vcmp.eq.f32.partialorder %v316, 2.0
      %vm637 = vcmp.eq.f32.partialorder %v317, 2.0
      %vm638 = vcmp.eq.f32.partialorder %v318, 2.0
      %vm639 = vcmp.eq.f32.partialorder %v319, 2.0
      %vm640 = vcmp.eq.f32.partialorder %v320, 2.0
      %vm641 = vcmp.eq.f32.partialorder %v321, 2.0
      %vm642 = vcmp.eq.f32.partialorder %v322, 2.0
      %vm643 = vcmp.eq.f32.partialorder %v323, 2.0
      %vm644 = vcmp.eq.f32.partialorder %v324, 2.0
      %vm645 = vcmp.eq.f32.partialorder %v325, 2.0
      %vm646 = vcmp.eq.f32.partialorder %v326, 2.0
      %vm647 = vcmp.eq.f32.partialorder %v327, 2.0
      %vm648 = vcmp.eq.f32.partialorder %v328, 2.0
      %vm649 = vcmp.eq.f32.partialorder %v329, 2.0
      %vm650 = vcmp.eq.f32.partialorder %v330, 2.0
      %vm651 = vcmp.eq.f32.partialorder %v331, 2.0
      %vm652 = vcmp.eq.f32.partialorder %v332, 2.0
      %vm653 = vcmp.eq.f32.partialorder %v333, 2.0
      %vm654 = vcmp.eq.f32.partialorder %v334, 2.0
      %vm655 = vcmp.eq.f32.partialorder %v335, 2.0
      %vm656 = vcmp.eq.f32.partialorder %v336, 2.0
      %vm657 = vcmp.eq.f32.partialorder %v337, 2.0
      %vm658 = vcmp.eq.f32.partialorder %v338, 2.0
      %vm659 = vcmp.eq.f32.partialorder %v339, 2.0
      %vm660 = vcmp.eq.f32.partialorder %v340, 2.0
      %vm661 = vcmp.eq.f32.partialorder %v341, 2.0
      %vm662 = vcmp.eq.f32.partialorder %v342, 2.0
      %vm663 = vcmp.eq.f32.partialorder %v343, 2.0
      %vm664 = vcmp.eq.f32.partialorder %v344, 2.0
      %vm665 = vcmp.eq.f32.partialorder %v345, 2.0
      %v666 = vsel %vm634, %v287, 0.0
      %v667 = vsel %vm635, %v287, 0.0
      %v668 = vsel %vm636, %v287, 0.0
      %v669 = vsel %vm637, %v287, 0.0
      %v670 = vsel %vm638, %v287, 0.0
      %v671 = vsel %vm639, %v287, 0.0
      %v672 = vsel %vm640, %v287, 0.0
      %v673 = vsel %vm641, %v287, 0.0
      %v674 = vsel %vm642, %v287, 0.0
      %v675 = vsel %vm643, %v287, 0.0
      %v676 = vsel %vm644, %v287, 0.0
      %v677 = vsel %vm645, %v287, 0.0
      %v678 = vsel %vm646, %v287, 0.0
      %v679 = vsel %vm647, %v287, 0.0
      %v680 = vsel %vm648, %v287, 0.0
      %v681 = vsel %vm649, %v287, 0.0
      %v682 = vsel %vm650, %v287, 0.0
      %v683 = vsel %vm651, %v287, 0.0
      %v684 = vsel %vm652, %v287, 0.0
      %v685 = vsel %vm653, %v287, 0.0
      %v686 = vsel %vm654, %v287, 0.0
      %v687 = vsel %vm655, %v287, 0.0
      %v688 = vsel %vm656, %v287, 0.0
      %v689 = vsel %vm657, %v287, 0.0
      %v690 = vsel %vm658, %v287, 0.0
      %v691 = vsel %vm659, %v287, 0.0
      %v692 = vsel %vm660, %v287, 0.0
      %v693 = vsel %vm661, %v287, 0.0
      %v694 = vsel %vm662, %v287, 0.0
      %v695 = vsel %vm663, %v287, 0.0
      %v696 = vsel %vm664, %v287, 0.0
      %v697 = vsel %vm665, %v287, 0.0
      %v698 = vadd.f32 %v602, %v666
      %v699 = vadd.f32 %v603, %v667
      %v700 = vadd.f32 %v604, %v668
      %v701 = vadd.f32 %v605, %v669
      %v702 = vadd.f32 %v606, %v670
      %v703 = vadd.f32 %v607, %v671
      %v704 = vadd.f32 %v608, %v672
      %v705 = vadd.f32 %v609, %v673
      %v706 = vadd.f32 %v610, %v674
      %v707 = vadd.f32 %v611, %v675
      %v708 = vadd.f32 %v612, %v676
      %v709 = vadd.f32 %v613, %v677
      %v710 = vadd.f32 %v614, %v678
      %v711 = vadd.f32 %v615, %v679
      %v712 = vadd.f32 %v616, %v680
      %v713 = vadd.f32 %v617, %v681
      %v714 = vadd.f32 %v618, %v682
      %v715 = vadd.f32 %v619, %v683
      %v716 = vadd.f32 %v620, %v684
      %v717 = vadd.f32 %v621, %v685
      %v718 = vadd.f32 %v622, %v686
      %v719 = vadd.f32 %v623, %v687
      %v720 = vadd.f32 %v624, %v688
      %v721 = vadd.f32 %v625, %v689
      %v722 = vadd.f32 %v626, %v690
      %v723 = vadd.f32 %v627, %v691
      %v724 = vadd.f32 %v628, %v692
      %v725 = vadd.f32 %v629, %v693
      %v726 = vadd.f32 %v630, %v694
      %v727 = vadd.f32 %v631, %v695
      %v728 = vadd.f32 %v632, %v696
      %v729 = vadd.f32 %v633, %v697
      %vm730 = vcmp.eq.f32.partialorder %v346, -1.0
      %vm731 = vcmp.eq.f32.partialorder %v347, -1.0
      %vm732 = vcmp.eq.f32.partialorder %v348, -1.0
      %vm733 = vcmp.eq.f32.partialorder %v349, -1.0
      %vm734 = vcmp.eq.f32.partialorder %v350, -1.0
      %vm735 = vcmp.eq.f32.partialorder %v351, -1.0
      %vm736 = vcmp.eq.f32.partialorder %v352, -1.0
      %vm737 = vcmp.eq.f32.partialorder %v353, -1.0
      %vm738 = vcmp.eq.f32.partialorder %v354, -1.0
      %vm739 = vcmp.eq.f32.partialorder %v355, -1.0
      %vm740 = vcmp.eq.f32.partialorder %v356, -1.0
      %vm741 = vcmp.eq.f32.partialorder %v357, -1.0
      %vm742 = vcmp.eq.f32.partialorder %v358, -1.0
      %vm743 = vcmp.eq.f32.partialorder %v359, -1.0
      %vm744 = vcmp.eq.f32.partialorder %v360, -1.0
      %vm745 = vcmp.eq.f32.partialorder %v361, -1.0
      %vm746 = vcmp.eq.f32.partialorder %v362, -1.0
      %vm747 = vcmp.eq.f32.partialorder %v363, -1.0
      %vm748 = vcmp.eq.f32.partialorder %v364, -1.0
      %vm749 = vcmp.eq.f32.partialorder %v365, -1.0
      %vm750 = vcmp.eq.f32.partialorder %v366, -1.0
      %vm751 = vcmp.eq.f32.partialorder %v367, -1.0
      %vm752 = vcmp.eq.f32.partialorder %v368, -1.0
      %vm753 = vcmp.eq.f32.partialorder %v369, -1.0
      %vm754 = vcmp.eq.f32.partialorder %v370, -1.0
      %vm755 = vcmp.eq.f32.partialorder %v371, -1.0
      %vm756 = vcmp.eq.f32.partialorder %v372, -1.0
      %vm757 = vcmp.eq.f32.partialorder %v373, -1.0
      %vm758 = vcmp.eq.f32.partialorder %v374, -1.0
      %vm759 = vcmp.eq.f32.partialorder %v375, -1.0
      %vm760 = vcmp.eq.f32.partialorder %v376, -1.0
      %vm761 = vcmp.eq.f32.partialorder %v377, -1.0
      %v762 = vsel %vm730, %v295, 0.0
      %v763 = vsel %vm731, %v295, 0.0
      %v764 = vsel %vm732, %v295, 0.0
      %v765 = vsel %vm733, %v295, 0.0
      %v766 = vsel %vm734, %v295, 0.0
      %v767 = vsel %vm735, %v295, 0.0
      %v768 = vsel %vm736, %v295, 0.0
      %v769 = vsel %vm737, %v295, 0.0
      %v770 = vsel %vm738, %v295, 0.0
      %v771 = vsel %vm739, %v295, 0.0
      %v772 = vsel %vm740, %v295, 0.0
      %v773 = vsel %vm741, %v295, 0.0
      %v774 = vsel %vm742, %v295, 0.0
      %v775 = vsel %vm743, %v295, 0.0
      %v776 = vsel %vm744, %v295, 0.0
      %v777 = vsel %vm745, %v295, 0.0
      %v778 = vsel %vm746, %v295, 0.0
      %v779 = vsel %vm747, %v295, 0.0
      %v780 = vsel %vm748, %v295, 0.0
      %v781 = vsel %vm749, %v295, 0.0
      %v782 = vsel %vm750, %v295, 0.0
      %v783 = vsel %vm751, %v295, 0.0
      %v784 = vsel %vm752, %v295, 0.0
      %v785 = vsel %vm753, %v295, 0.0
      %v786 = vsel %vm754, %v295, 0.0
      %v787 = vsel %vm755, %v295, 0.0
      %v788 = vsel %vm756, %v295, 0.0
      %v789 = vsel %vm757, %v295, 0.0
      %v790 = vsel %vm758, %v295, 0.0
      %v791 = vsel %vm759, %v295, 0.0
      %v792 = vsel %vm760, %v295, 0.0
      %v793 = vsel %vm761, %v295, 0.0
      %vm794 = vcmp.eq.f32.partialorder %v346, 0.0
      %vm795 = vcmp.eq.f32.partialorder %v347, 0.0
      %vm796 = vcmp.eq.f32.partialorder %v348, 0.0
      %vm797 = vcmp.eq.f32.partialorder %v349, 0.0
      %vm798 = vcmp.eq.f32.partialorder %v350, 0.0
      %vm799 = vcmp.eq.f32.partialorder %v351, 0.0
      %vm800 = vcmp.eq.f32.partialorder %v352, 0.0
      %vm801 = vcmp.eq.f32.partialorder %v353, 0.0
      %vm802 = vcmp.eq.f32.partialorder %v354, 0.0
      %vm803 = vcmp.eq.f32.partialorder %v355, 0.0
      %vm804 = vcmp.eq.f32.partialorder %v356, 0.0
      %vm805 = vcmp.eq.f32.partialorder %v357, 0.0
      %vm806 = vcmp.eq.f32.partialorder %v358, 0.0
      %vm807 = vcmp.eq.f32.partialorder %v359, 0.0
      %vm808 = vcmp.eq.f32.partialorder %v360, 0.0
      %vm809 = vcmp.eq.f32.partialorder %v361, 0.0
      %vm810 = vcmp.eq.f32.partialorder %v362, 0.0
      %vm811 = vcmp.eq.f32.partialorder %v363, 0.0
      %vm812 = vcmp.eq.f32.partialorder %v364, 0.0
      %vm813 = vcmp.eq.f32.partialorder %v365, 0.0
      %vm814 = vcmp.eq.f32.partialorder %v366, 0.0
      %vm815 = vcmp.eq.f32.partialorder %v367, 0.0
      %vm816 = vcmp.eq.f32.partialorder %v368, 0.0
      %vm817 = vcmp.eq.f32.partialorder %v369, 0.0
      %vm818 = vcmp.eq.f32.partialorder %v370, 0.0
      %vm819 = vcmp.eq.f32.partialorder %v371, 0.0
      %vm820 = vcmp.eq.f32.partialorder %v372, 0.0
      %vm821 = vcmp.eq.f32.partialorder %v373, 0.0
      %vm822 = vcmp.eq.f32.partialorder %v374, 0.0
      %vm823 = vcmp.eq.f32.partialorder %v375, 0.0
      %vm824 = vcmp.eq.f32.partialorder %v376, 0.0
      %vm825 = vcmp.eq.f32.partialorder %v377, 0.0
      %v826 = vsel %vm794, %v300, 0.0
      %v827 = vsel %vm795, %v300, 0.0
      %v828 = vsel %vm796, %v300, 0.0
      %v829 = vsel %vm797, %v300, 0.0
      %v830 = vsel %vm798, %v300, 0.0
      %v831 = vsel %vm799, %v300, 0.0
      %v832 = vsel %vm800, %v300, 0.0
      %v833 = vsel %vm801, %v300, 0.0
      %v834 = vsel %vm802, %v300, 0.0
      %v835 = vsel %vm803, %v300, 0.0
      %v836 = vsel %vm804, %v300, 0.0
      %v837 = vsel %vm805, %v300, 0.0
      %v838 = vsel %vm806, %v300, 0.0
      %v839 = vsel %vm807, %v300, 0.0
      %v840 = vsel %vm808, %v300, 0.0
      %v841 = vsel %vm809, %v300, 0.0
      %v842 = vsel %vm810, %v300, 0.0
      %v843 = vsel %vm811, %v300, 0.0
      %v844 = vsel %vm812, %v300, 0.0
      %v845 = vsel %vm813, %v300, 0.0
      %v846 = vsel %vm814, %v300, 0.0
      %v847 = vsel %vm815, %v300, 0.0
      %v848 = vsel %vm816, %v300, 0.0
      %v849 = vsel %vm817, %v300, 0.0
      %v850 = vsel %vm818, %v300, 0.0
      %v851 = vsel %vm819, %v300, 0.0
      %v852 = vsel %vm820, %v300, 0.0
      %v853 = vsel %vm821, %v300, 0.0
      %v854 = vsel %vm822, %v300, 0.0
      %v855 = vsel %vm823, %v300, 0.0
      %v856 = vsel %vm824, %v300, 0.0
      %v857 = vsel %vm825, %v300, 0.0
      %v858 = vadd.f32 %v762, %v826
      %v859 = vadd.f32 %v763, %v827
      %v860 = vadd.f32 %v764, %v828
      %v861 = vadd.f32 %v765, %v829
      %v862 = vadd.f32 %v766, %v830
      %v863 = vadd.f32 %v767, %v831
      %v864 = vadd.f32 %v768, %v832
      %v865 = vadd.f32 %v769, %v833
      %v866 = vadd.f32 %v770, %v834
      %v867 = vadd.f32 %v771, %v835
      %v868 = vadd.f32 %v772, %v836
      %v869 = vadd.f32 %v773, %v837
      %v870 = vadd.f32 %v774, %v838
      %v871 = vadd.f32 %v775, %v839
      %v872 = vadd.f32 %v776, %v840
      %v873 = vadd.f32 %v777, %v841
      %v874 = vadd.f32 %v778, %v842
      %v875 = vadd.f32 %v779, %v843
      %v876 = vadd.f32 %v780, %v844
      %v877 = vadd.f32 %v781, %v845
      %v878 = vadd.f32 %v782, %v846
      %v879 = vadd.f32 %v783, %v847
      %v880 = vadd.f32 %v784, %v848
      %v881 = vadd.f32 %v785, %v849
      %v882 = vadd.f32 %v786, %v850
      %v883 = vadd.f32 %v787, %v851
      %v884 = vadd.f32 %v788, %v852
      %v885 = vadd.f32 %v789, %v853
      %v886 = vadd.f32 %v790, %v854
      %v887 = vadd.f32 %v791, %v855
      %v888 = vadd.f32 %v792, %v856
      %v889 = vadd.f32 %v793, %v857
      %vm890 = vcmp.eq.f32.partialorder %v346, 1.0
      %vm891 = vcmp.eq.f32.partialorder %v347, 1.0
      %vm892 = vcmp.eq.f32.partialorder %v348, 1.0
      %vm893 = vcmp.eq.f32.partialorder %v349, 1.0
      %vm894 = vcmp.eq.f32.partialorder %v350, 1.0
      %vm895 = vcmp.eq.f32.partialorder %v351, 1.0
      %vm896 = vcmp.eq.f32.partialorder %v352, 1.0
      %vm897 = vcmp.eq.f32.partialorder %v353, 1.0
      %vm898 = vcmp.eq.f32.partialorder %v354, 1.0
      %vm899 = vcmp.eq.f32.partialorder %v355, 1.0
      %vm900 = vcmp.eq.f32.partialorder %v356, 1.0
      %vm901 = vcmp.eq.f32.partialorder %v357, 1.0
      %vm902 = vcmp.eq.f32.partialorder %v358, 1.0
      %vm903 = vcmp.eq.f32.partialorder %v359, 1.0
      %vm904 = vcmp.eq.f32.partialorder %v360, 1.0
      %vm905 = vcmp.eq.f32.partialorder %v361, 1.0
      %vm906 = vcmp.eq.f32.partialorder %v362, 1.0
      %vm907 = vcmp.eq.f32.partialorder %v363, 1.0
      %vm908 = vcmp.eq.f32.partialorder %v364, 1.0
      %vm909 = vcmp.eq.f32.partialorder %v365, 1.0
      %vm910 = vcmp.eq.f32.partialorder %v366, 1.0
      %vm911 = vcmp.eq.f32.partialorder %v367, 1.0
      %vm912 = vcmp.eq.f32.partialorder %v368, 1.0
      %vm913 = vcmp.eq.f32.partialorder %v369, 1.0
      %vm914 = vcmp.eq.f32.partialorder %v370, 1.0
      %vm915 = vcmp.eq.f32.partialorder %v371, 1.0
      %vm916 = vcmp.eq.f32.partialorder %v372, 1.0
      %vm917 = vcmp.eq.f32.partialorder %v373, 1.0
      %vm918 = vcmp.eq.f32.partialorder %v374, 1.0
      %vm919 = vcmp.eq.f32.partialorder %v375, 1.0
      %vm920 = vcmp.eq.f32.partialorder %v376, 1.0
      %vm921 = vcmp.eq.f32.partialorder %v377, 1.0
      %v922 = vsel %vm890, %v306, 0.0
      %v923 = vsel %vm891, %v306, 0.0
      %v924 = vsel %vm892, %v306, 0.0
      %v925 = vsel %vm893, %v306, 0.0
      %v926 = vsel %vm894, %v306, 0.0
      %v927 = vsel %vm895, %v306, 0.0
      %v928 = vsel %vm896, %v306, 0.0
      %v929 = vsel %vm897, %v306, 0.0
      %v930 = vsel %vm898, %v306, 0.0
      %v931 = vsel %vm899, %v306, 0.0
      %v932 = vsel %vm900, %v306, 0.0
      %v933 = vsel %vm901, %v306, 0.0
      %v934 = vsel %vm902, %v306, 0.0
      %v935 = vsel %vm903, %v306, 0.0
      %v936 = vsel %vm904, %v306, 0.0
      %v937 = vsel %vm905, %v306, 0.0
      %v938 = vsel %vm906, %v306, 0.0
      %v939 = vsel %vm907, %v306, 0.0
      %v940 = vsel %vm908, %v306, 0.0
      %v941 = vsel %vm909, %v306, 0.0
      %v942 = vsel %vm910, %v306, 0.0
      %v943 = vsel %vm911, %v306, 0.0
      %v944 = vsel %vm912, %v306, 0.0
      %v945 = vsel %vm913, %v306, 0.0
      %v946 = vsel %vm914, %v306, 0.0
      %v947 = vsel %vm915, %v306, 0.0
      %v948 = vsel %vm916, %v306, 0.0
      %v949 = vsel %vm917, %v306, 0.0
      %v950 = vsel %vm918, %v306, 0.0
      %v951 = vsel %vm919, %v306, 0.0
      %v952 = vsel %vm920, %v306, 0.0
      %v953 = vsel %vm921, %v306, 0.0
      %v954 = vadd.f32 %v858, %v922
      %v955 = vadd.f32 %v859, %v923
      %v956 = vadd.f32 %v860, %v924
      %v957 = vadd.f32 %v861, %v925
      %v958 = vadd.f32 %v862, %v926
      %v959 = vadd.f32 %v863, %v927
      %v960 = vadd.f32 %v864, %v928
      %v961 = vadd.f32 %v865, %v929
      %v962 = vadd.f32 %v866, %v930
      %v963 = vadd.f32 %v867, %v931
      %v964 = vadd.f32 %v868, %v932
      %v965 = vadd.f32 %v869, %v933
      %v966 = vadd.f32 %v870, %v934
      %v967 = vadd.f32 %v871, %v935
      %v968 = vadd.f32 %v872, %v936
      %v969 = vadd.f32 %v873, %v937
      %v970 = vadd.f32 %v874, %v938
      %v971 = vadd.f32 %v875, %v939
      %v972 = vadd.f32 %v876, %v940
      %v973 = vadd.f32 %v877, %v941
      %v974 = vadd.f32 %v878, %v942
      %v975 = vadd.f32 %v879, %v943
      %v976 = vadd.f32 %v880, %v944
      %v977 = vadd.f32 %v881, %v945
      %v978 = vadd.f32 %v882, %v946
      %v979 = vadd.f32 %v883, %v947
      %v980 = vadd.f32 %v884, %v948
      %v981 = vadd.f32 %v885, %v949
      %v982 = vadd.f32 %v886, %v950
      %v983 = vadd.f32 %v887, %v951
      %v984 = vadd.f32 %v888, %v952
      %v985 = vadd.f32 %v889, %v953
      %vm986 = vcmp.eq.f32.partialorder %v346, 2.0
      %vm987 = vcmp.eq.f32.partialorder %v347, 2.0
      %vm988 = vcmp.eq.f32.partialorder %v348, 2.0
      %vm989 = vcmp.eq.f32.partialorder %v349, 2.0
      %vm990 = vcmp.eq.f32.partialorder %v350, 2.0
      %vm991 = vcmp.eq.f32.partialorder %v351, 2.0
      %vm992 = vcmp.eq.f32.partialorder %v352, 2.0
      %vm993 = vcmp.eq.f32.partialorder %v353, 2.0
      %vm994 = vcmp.eq.f32.partialorder %v354, 2.0
      %vm995 = vcmp.eq.f32.partialorder %v355, 2.0
      %vm996 = vcmp.eq.f32.partialorder %v356, 2.0
      %vm997 = vcmp.eq.f32.partialorder %v357, 2.0
      %vm998 = vcmp.eq.f32.partialorder %v358, 2.0
      %vm999 = vcmp.eq.f32.partialorder %v359, 2.0
      %vm1000 = vcmp.eq.f32.partialorder %v360, 2.0
      %vm1001 = vcmp.eq.f32.partialorder %v361, 2.0
      %vm1002 = vcmp.eq.f32.partialorder %v362, 2.0
      %vm1003 = vcmp.eq.f32.partialorder %v363, 2.0
      %vm1004 = vcmp.eq.f32.partialorder %v364, 2.0
      %vm1005 = vcmp.eq.f32.partialorder %v365, 2.0
      %vm1006 = vcmp.eq.f32.partialorder %v366, 2.0
      %vm1007 = vcmp.eq.f32.partialorder %v367, 2.0
      %vm1008 = vcmp.eq.f32.partialorder %v368, 2.0
      %vm1009 = vcmp.eq.f32.partialorder %v369, 2.0
      %vm1010 = vcmp.eq.f32.partialorder %v370, 2.0
      %vm1011 = vcmp.eq.f32.partialorder %v371, 2.0
      %vm1012 = vcmp.eq.f32.partialorder %v372, 2.0
      %vm1013 = vcmp.eq.f32.partialorder %v373, 2.0
      %vm1014 = vcmp.eq.f32.partialorder %v374, 2.0
      %vm1015 = vcmp.eq.f32.partialorder %v375, 2.0
      %vm1016 = vcmp.eq.f32.partialorder %v376, 2.0
      %vm1017 = vcmp.eq.f32.partialorder %v377, 2.0
      %v1018 = vsel %vm986, %v313, 0.0
      %v1019 = vsel %vm987, %v313, 0.0
      %v1020 = vsel %vm988, %v313, 0.0
      %v1021 = vsel %vm989, %v313, 0.0
      %v1022 = vsel %vm990, %v313, 0.0
      %v1023 = vsel %vm991, %v313, 0.0
      %v1024 = vsel %vm992, %v313, 0.0
      %v1025 = vsel %vm993, %v313, 0.0
      %v1026 = vsel %vm994, %v313, 0.0
      %v1027 = vsel %vm995, %v313, 0.0
      %v1028 = vsel %vm996, %v313, 0.0
      %v1029 = vsel %vm997, %v313, 0.0
      %v1030 = vsel %vm998, %v313, 0.0
      %v1031 = vsel %vm999, %v313, 0.0
      %v1032 = vsel %vm1000, %v313, 0.0
      %v1033 = vsel %vm1001, %v313, 0.0
      %v1034 = vsel %vm1002, %v313, 0.0
      %v1035 = vsel %vm1003, %v313, 0.0
      %v1036 = vsel %vm1004, %v313, 0.0
      %v1037 = vsel %vm1005, %v313, 0.0
      %v1038 = vsel %vm1006, %v313, 0.0
      %v1039 = vsel %vm1007, %v313, 0.0
      %v1040 = vsel %vm1008, %v313, 0.0
      %v1041 = vsel %vm1009, %v313, 0.0
      %v1042 = vsel %vm1010, %v313, 0.0
      %v1043 = vsel %vm1011, %v313, 0.0
      %v1044 = vsel %vm1012, %v313, 0.0
      %v1045 = vsel %vm1013, %v313, 0.0
      %v1046 = vsel %vm1014, %v313, 0.0
      %v1047 = vsel %vm1015, %v313, 0.0
      %v1048 = vsel %vm1016, %v313, 0.0
      %v1049 = vsel %vm1017, %v313, 0.0
      %v1050 = vadd.f32 %v954, %v1018
      %v1051 = vadd.f32 %v955, %v1019
      %v1052 = vadd.f32 %v956, %v1020
      %v1053 = vadd.f32 %v957, %v1021
      %v1054 = vadd.f32 %v958, %v1022
      %v1055 = vadd.f32 %v959, %v1023
      %v1056 = vadd.f32 %v960, %v1024
      %v1057 = vadd.f32 %v961, %v1025
      %v1058 = vadd.f32 %v962, %v1026
      %v1059 = vadd.f32 %v963, %v1027
      %v1060 = vadd.f32 %v964, %v1028
      %v1061 = vadd.f32 %v965, %v1029
      %v1062 = vadd.f32 %v966, %v1030
      %v1063 = vadd.f32 %v967, %v1031
      %v1064 = vadd.f32 %v968, %v1032
      %v1065 = vadd.f32 %v969, %v1033
      %v1066 = vadd.f32 %v970, %v1034
      %v1067 = vadd.f32 %v971, %v1035
      %v1068 = vadd.f32 %v972, %v1036
      %v1069 = vadd.f32 %v973, %v1037
      %v1070 = vadd.f32 %v974, %v1038
      %v1071 = vadd.f32 %v975, %v1039
      %v1072 = vadd.f32 %v976, %v1040
      %v1073 = vadd.f32 %v977, %v1041
      %v1074 = vadd.f32 %v978, %v1042
      %v1075 = vadd.f32 %v979, %v1043
      %v1076 = vadd.f32 %v980, %v1044
      %v1077 = vadd.f32 %v981, %v1045
      %v1078 = vadd.f32 %v982, %v1046
      %v1079 = vadd.f32 %v983, %v1047
      %v1080 = vadd.f32 %v984, %v1048
      %v1081 = vadd.f32 %v985, %v1049
      %v1082 = vmul.f32 %v698, %v1050
      %v1083 = vmul.f32 %v699, %v1051
      %v1084 = vmul.f32 %v700, %v1052
      %v1085 = vmul.f32 %v701, %v1053
      %v1086 = vmul.f32 %v702, %v1054
      %v1087 = vmul.f32 %v703, %v1055
      %v1088 = vmul.f32 %v704, %v1056
      %v1089 = vmul.f32 %v705, %v1057
      %v1090 = vmul.f32 %v706, %v1058
      %v1091 = vmul.f32 %v707, %v1059
      %v1092 = vmul.f32 %v708, %v1060
      %v1093 = vmul.f32 %v709, %v1061
      %v1094 = vmul.f32 %v710, %v1062
      %v1095 = vmul.f32 %v711, %v1063
      %v1096 = vmul.f32 %v712, %v1064
      %v1097 = vmul.f32 %v713, %v1065
      %v1098 = vmul.f32 %v714, %v1066
      %v1099 = vmul.f32 %v715, %v1067
      %v1100 = vmul.f32 %v716, %v1068
      %v1101 = vmul.f32 %v717, %v1069
      %v1102 = vmul.f32 %v718, %v1070
      %v1103 = vmul.f32 %v719, %v1071
      %v1104 = vmul.f32 %v720, %v1072
      %v1105 = vmul.f32 %v721, %v1073
      %v1106 = vmul.f32 %v722, %v1074
      %v1107 = vmul.f32 %v723, %v1075
      %v1108 = vmul.f32 %v724, %v1076
      %v1109 = vmul.f32 %v725, %v1077
      %v1110 = vmul.f32 %v726, %v1078
      %v1111 = vmul.f32 %v727, %v1079
      %v1112 = vmul.f32 %v728, %v1080
      %v1113 = vmul.f32 %v729, %v1081
      %s1114 = smul.u32 %s38, 2
      %s1115 = smul.addr %s1114, 4
      %s1116 = scalar_lea.vmem %s1, %s1115
      %v1117 = vld [vmem:[%s1116] sm:$0xff]
      %v1119 = vcombine.high %v1117, %v1117
      %1121 = vmatprep.subr.mxu0 0.0
      %1122 = vmatpush1.msra.mxu0 %v1082
      %1123 = vmatprep.subr.mxu0 0.0
      %1124 = vmatpush1.msra.mxu0 %v1083
      %1125 = vmatprep.subr.mxu0 0.0
      %1126 = vmatpush1.msra.mxu0 %v1084
      %1127 = vmatprep.subr.mxu0 0.0
      %1128 = vmatpush1.msra.mxu0 %v1085
      %1129 = vmatprep.subr.mxu0 0.0
      %1130 = vmatpush1.msra.mxu0 %v1086
      %1131 = vmatprep.subr.mxu0 0.0
      %1132 = vmatpush1.msra.mxu0 %v1087
      %1133 = vmatprep.subr.mxu0 0.0
      %1134 = vmatpush1.msra.mxu0 %v1088
      %1135 = vmatprep.subr.mxu0 0.0
      %1136 = vmatpush1.msra.mxu0 %v1089
      %1137 = vmatprep.subr.mxu0 0.0
      %1138 = vmatpush1.msra.mxu0 %v1090
      %1139 = vmatprep.subr.mxu0 0.0
      %1140 = vmatpush1.msra.mxu0 %v1091
      %1141 = vmatprep.subr.mxu0 0.0
      %1142 = vmatpush1.msra.mxu0 %v1092
      %1143 = vmatprep.subr.mxu0 0.0
      %1144 = vmatpush1.msra.mxu0 %v1093
      %1145 = vmatprep.subr.mxu0 0.0
      %1146 = vmatpush1.msra.mxu0 %v1094
      %1147 = vmatprep.subr.mxu0 0.0
      %1148 = vmatpush1.msra.mxu0 %v1095
      %1149 = vmatprep.subr.mxu0 0.0
      %1150 = vmatpush1.msra.mxu0 %v1096
      %1151 = vmatprep.subr.mxu0 0.0
      %1152 = vmatpush1.msra.mxu0 %v1097
      %1153 = vmatprep.subr.mxu0 0.0
      %1154 = vmatpush1.msra.mxu0 %v1098
      %1155 = vmatprep.subr.mxu0 0.0
      %1156 = vmatpush1.msra.mxu0 %v1099
      %1157 = vmatprep.subr.mxu0 0.0
      %1158 = vmatpush1.msra.mxu0 %v1100
      %1159 = vmatprep.subr.mxu0 0.0
      %1160 = vmatpush1.msra.mxu0 %v1101
      %1161 = vmatprep.subr.mxu0 0.0
      %1162 = vmatpush1.msra.mxu0 %v1102
      %1163 = vmatprep.subr.mxu0 0.0
      %1164 = vmatpush1.msra.mxu0 %v1103
      %1165 = vmatprep.subr.mxu0 0.0
      %1166 = vmatpush1.msra.mxu0 %v1104
      %1167 = vmatprep.subr.mxu0 0.0
      %1168 = vmatpush1.msra.mxu0 %v1105
      %1169 = vmatprep.subr.mxu0 0.0
      %1170 = vmatpush1.msra.mxu0 %v1106
      %1171 = vmatprep.subr.mxu0 0.0
      %1172 = vmatpush1.msra.mxu0 %v1107
      %1173 = vmatprep.subr.mxu0 0.0
      %1174 = vmatpush1.msra.mxu0 %v1108
      %1175 = vmatprep.subr.mxu0 0.0
      %1176 = vmatpush1.msra.mxu0 %v1109
      %1177 = vmatprep.subr.mxu0 0.0
      %1178 = vmatpush1.msra.mxu0 %v1110
      %1179 = vmatprep.subr.mxu0 0.0
      %1180 = vmatpush1.msra.mxu0 %v1111
      %1181 = vmatprep.subr.mxu0 0.0
      %1182 = vmatpush1.msra.mxu0 %v1112
      %1183 = vmatprep.subr.mxu0 0.0
      %1184 = vmatpush1.msra.mxu0 %v1113
      %1185 = vmatprep.mubr.f32.mxu0 %v1119
      %1186 = vmatmul.mubr.f32.gmra.mrb[0].mxu0 %v1117
      %v1187 = vpop.f32.mrb[0].mxu0
      %v1188 = vadd.f32 0.0, %v1187
      %v1189 = vpop.f32.mrb[0].mxu0
      %1190 = vdwg.mxu0
      %s1191 = smul.u32 %s38, 4
      %s1192 = scalar_lea.vmem [#allocation2], %s1191
      %vm1193 = vcmask 519168
      %1194 = vst.msk [vmem:[%s1192] sm:$0xf] %vm1193, %v1188
    $region26: #{tpu_custom_call.1} parent=1 // loop_footer
      %s40 = sadd.s32 %s38, 1
    $region27: #{tpu_custom_call.1} parent=1 // loop_footer_branch
      %37 = sbr.rel target = $region23
    $region28: #{tpu_custom_call.1} parent=1 // loop_exit
      _
    %v1195 = vld [vmem:[%s2] sm:$0xff]
    %v1196 = vld [vmem:[#allocation2] sm:$0x1]
    %v1197 = vld [vmem:[#allocation2 + $0x4] sm:$0x1]
    %v1198 = vld [vmem:[#allocation2 + $0x8] sm:$0x1]
    %v1199 = vld [vmem:[#allocation2 + $0xc] sm:$0x1]
    %v1200 = vld [vmem:[#allocation2 + $0x10] sm:$0x1]
    %v1201 = vld [vmem:[#allocation2 + $0x14] sm:$0x1]
    %v1202 = vld [vmem:[#allocation2 + $0x18] sm:$0x1]
    %v1203 = vld [vmem:[#allocation2 + $0x1c] sm:$0x1]
    %v1204 = vld [vmem:[%s3] sm:$0xff]
    %v1205 = vld [vmem:[%s3 + $0x8] sm:$0xff]
    %v1206 = vld [vmem:[%s3 + $0x10] sm:$0xff]
    %v1207 = vld [vmem:[%s3 + $0x18] sm:$0xff]
    %v1208 = vld [vmem:[%s3 + $0x20] sm:$0xff]
    %v1209 = vld [vmem:[%s3 + $0x28] sm:$0xff]
    %v1210 = vld [vmem:[%s3 + $0x30] sm:$0xff]
    %v1211 = vld [vmem:[%s3 + $0x38] sm:$0xff]
    %v1220 = vrot.slane %v1197, 7
    %vm1221 = vcmask 1041409
    %v1222 = vsel %vm1221, %v1220, %v1196
    %v1223 = vrot.slane %v1198, 6
    %vm1224 = vcmask 1042434
    %v1225 = vsel %vm1224, %v1223, %v1222
    %v1226 = vrot.slane %v1199, 5
    %vm1227 = vcmask 1043459
    %v1228 = vsel %vm1227, %v1226, %v1225
    %v1229 = vrot.slane %v1200, 4
    %vm1230 = vcmask 1044484
    %v1231 = vsel %vm1230, %v1229, %v1228
    %v1232 = vrot.slane %v1201, 3
    %vm1233 = vcmask 1045509
    %v1234 = vsel %vm1233, %v1232, %v1231
    %v1235 = vrot.slane %v1202, 2
    %vm1236 = vcmask 1046534
    %v1237 = vsel %vm1236, %v1235, %v1234
    %v1238 = vrot.slane %v1203, 1
    %vm1239 = vcmask 1047559
    %v1240 = vsel %vm1239, %v1238, %v1237
    %vm1241 = vcmask 523264
    %v1242 = vsel %vm1241, %v1240, 0
    %1244 = vmatprep.subr.mxu0 0.0
    %1245 = vmatpush1.msra.mxu0 %v1204
    %1246 = vmatprep.subr.mxu0 0.0
    %1247 = vmatpush1.msra.mxu0 %v1205
    %1248 = vmatprep.subr.mxu0 0.0
    %1249 = vmatpush1.msra.mxu0 %v1206
    %1250 = vmatprep.subr.mxu0 0.0
    %1251 = vmatpush1.msra.mxu0 %v1207
    %1252 = vmatprep.subr.mxu0 0.0
    %1253 = vmatpush1.msra.mxu0 %v1208
    %1254 = vmatprep.subr.mxu0 0.0
    %1255 = vmatpush1.msra.mxu0 %v1209
    %1256 = vmatprep.subr.mxu0 0.0
    %1257 = vmatpush1.msra.mxu0 %v1210
    %1258 = vmatprep.subr.mxu0 0.0
    %1259 = vmatpush1.msra.mxu0 %v1211
    %1260 = vmatprep.subr.mxu0 0.0
    %1261 = vmatpush1.msra.mxu0 0.0
    %1262 = vmatprep.subr.mxu0 0.0
    %1263 = vmatpush1.msra.mxu0 0.0
    %1264 = vmatprep.subr.mxu0 0.0
    %1265 = vmatpush1.msra.mxu0 0.0
    %1266 = vmatprep.subr.mxu0 0.0
    %1267 = vmatpush1.msra.mxu0 0.0
    %1268 = vmatprep.subr.mxu0 0.0
    %1269 = vmatpush1.msra.mxu0 0.0
    %1270 = vmatprep.subr.mxu0 0.0
    %1271 = vmatpush1.msra.mxu0 0.0
    %1272 = vmatprep.subr.mxu0 0.0
    %1273 = vmatpush1.msra.mxu0 0.0
    %1274 = vmatprep.subr.mxu0 0.0
    %1275 = vmatpush1.msra.mxu0 0.0
    %1276 = vmatprep.subr.mxu0 0.0
    %1277 = vmatpush1.msra.mxu0 0.0
    %1278 = vmatprep.subr.mxu0 0.0
    %1279 = vmatpush1.msra.mxu0 0.0
    %1280 = vmatprep.subr.mxu0 0.0
    %1281 = vmatpush1.msra.mxu0 0.0
    %1282 = vmatprep.subr.mxu0 0.0
    %1283 = vmatpush1.msra.mxu0 0.0
    %1284 = vmatprep.subr.mxu0 0.0
    %1285 = vmatpush1.msra.mxu0 0.0
    %1286 = vmatprep.subr.mxu0 0.0
    %1287 = vmatpush1.msra.mxu0 0.0
    %1288 = vmatprep.subr.mxu0 0.0
    %1289 = vmatpush1.msra.mxu0 0.0
    %1290 = vmatprep.subr.mxu0 0.0
    %1291 = vmatpush1.msra.mxu0 0.0
    %1292 = vmatprep.subr.mxu0 0.0
    %1293 = vmatpush1.msra.mxu0 0.0
    %1294 = vmatprep.subr.mxu0 0.0
    %1295 = vmatpush1.msra.mxu0 0.0
    %1296 = vmatprep.subr.mxu0 0.0
    %1297 = vmatpush1.msra.mxu0 0.0
    %1298 = vmatprep.subr.mxu0 0.0
    %1299 = vmatpush1.msra.mxu0 0.0
    %1300 = vmatprep.subr.mxu0 0.0
    %1301 = vmatpush1.msra.mxu0 0.0
    %1302 = vmatprep.subr.mxu0 0.0
    %1303 = vmatpush1.msra.mxu0 0.0
    %1304 = vmatprep.subr.mxu0 0.0
    %1305 = vmatpush1.msra.mxu0 0.0
    %1306 = vmatprep.subr.mxu0 0.0
    %1307 = vmatpush1.msra.mxu0 0.0
    %1308 = vmatprep.mubr.f32.mxu0 0.0
    %1309 = vmatmul.mubr.f32.gmra.mrb[0].mxu0 %v1242
    %v1310 = vpop.f32.mrb[0].mxu0
    %v1311 = vadd.f32 0.0, %v1310
    %v1312 = vpop.f32.mrb[0].mxu0
    %1313 = vdwg.mxu0
    %v1314 = vadd.f32 %v1195, %v1311
    %v1315 = vld [vmem:[#allocation2 + $0x1] sm:$0x1]
    %v1316 = vld [vmem:[#allocation2 + $0x5] sm:$0x1]
    %v1317 = vld [vmem:[#allocation2 + $0x9] sm:$0x1]
    %v1318 = vld [vmem:[#allocation2 + $0xd] sm:$0x1]
    %v1319 = vld [vmem:[#allocation2 + $0x11] sm:$0x1]
    %v1320 = vld [vmem:[#allocation2 + $0x15] sm:$0x1]
    %v1321 = vld [vmem:[#allocation2 + $0x19] sm:$0x1]
    %v1322 = vld [vmem:[#allocation2 + $0x1d] sm:$0x1]
    %s1323 = scalar_lea.vmem %s3, 64
    %v1324 = vld [vmem:[%s1323] sm:$0xff]
    %v1325 = vld [vmem:[%s1323 + $0x8] sm:$0xff]
    %v1326 = vld [vmem:[%s1323 + $0x10] sm:$0xff]
    %v1327 = vld [vmem:[%s1323 + $0x18] sm:$0xff]
    %v1328 = vld [vmem:[%s1323 + $0x20] sm:$0xff]
    %v1329 = vld [vmem:[%s1323 + $0x28] sm:$0xff]
    %v1330 = vld [vmem:[%s1323 + $0x30] sm:$0xff]
    %v1331 = vld [vmem:[%s1323 + $0x38] sm:$0xff]
    %v1340 = vrot.slane %v1316, 7
    %v1341 = vsel %vm1221, %v1340, %v1315
    %v1342 = vrot.slane %v1317, 6
    %v1343 = vsel %vm1224, %v1342, %v1341
    %v1344 = vrot.slane %v1318, 5
    %v1345 = vsel %vm1227, %v1344, %v1343
    %v1346 = vrot.slane %v1319, 4
    %v1347 = vsel %vm1230, %v1346, %v1345
    %v1348 = vrot.slane %v1320, 3
    %v1349 = vsel %vm1233, %v1348, %v1347
    %v1350 = vrot.slane %v1321, 2
    %v1351 = vsel %vm1236, %v1350, %v1349
    %v1352 = vrot.slane %v1322, 1
    %v1353 = vsel %vm1239, %v1352, %v1351
    %v1354 = vsel %vm1241, %v1353, 0
    %1356 = vmatprep.subr.mxu0 0.0
    %1357 = vmatpush1.msra.mxu0 %v1324
    %1358 = vmatprep.subr.mxu0 0.0
    %1359 = vmatpush1.msra.mxu0 %v1325
    %1360 = vmatprep.subr.mxu0 0.0
    %1361 = vmatpush1.msra.mxu0 %v1326
    %1362 = vmatprep.subr.mxu0 0.0
    %1363 = vmatpush1.msra.mxu0 %v1327
    %1364 = vmatprep.subr.mxu0 0.0
    %1365 = vmatpush1.msra.mxu0 %v1328
    %1366 = vmatprep.subr.mxu0 0.0
    %1367 = vmatpush1.msra.mxu0 %v1329
    %1368 = vmatprep.subr.mxu0 0.0
    %1369 = vmatpush1.msra.mxu0 %v1330
    %1370 = vmatprep.subr.mxu0 0.0
    %1371 = vmatpush1.msra.mxu0 %v1331
    %1372 = vmatprep.subr.mxu0 0.0
    %1373 = vmatpush1.msra.mxu0 0.0
    %1374 = vmatprep.subr.mxu0 0.0
    %1375 = vmatpush1.msra.mxu0 0.0
    %1376 = vmatprep.subr.mxu0 0.0
    %1377 = vmatpush1.msra.mxu0 0.0
    %1378 = vmatprep.subr.mxu0 0.0
    %1379 = vmatpush1.msra.mxu0 0.0
    %1380 = vmatprep.subr.mxu0 0.0
    %1381 = vmatpush1.msra.mxu0 0.0
    %1382 = vmatprep.subr.mxu0 0.0
    %1383 = vmatpush1.msra.mxu0 0.0
    %1384 = vmatprep.subr.mxu0 0.0
    %1385 = vmatpush1.msra.mxu0 0.0
    %1386 = vmatprep.subr.mxu0 0.0
    %1387 = vmatpush1.msra.mxu0 0.0
    %1388 = vmatprep.subr.mxu0 0.0
    %1389 = vmatpush1.msra.mxu0 0.0
    %1390 = vmatprep.subr.mxu0 0.0
    %1391 = vmatpush1.msra.mxu0 0.0
    %1392 = vmatprep.subr.mxu0 0.0
    %1393 = vmatpush1.msra.mxu0 0.0
    %1394 = vmatprep.subr.mxu0 0.0
    %1395 = vmatpush1.msra.mxu0 0.0
    %1396 = vmatprep.subr.mxu0 0.0
    %1397 = vmatpush1.msra.mxu0 0.0
    %1398 = vmatprep.subr.mxu0 0.0
    %1399 = vmatpush1.msra.mxu0 0.0
    %1400 = vmatprep.subr.mxu0 0.0
    %1401 = vmatpush1.msra.mxu0 0.0
    %1402 = vmatprep.subr.mxu0 0.0
    %1403 = vmatpush1.msra.mxu0 0.0
    %1404 = vmatprep.subr.mxu0 0.0
    %1405 = vmatpush1.msra.mxu0 0.0
    %1406 = vmatprep.subr.mxu0 0.0
    %1407 = vmatpush1.msra.mxu0 0.0
    %1408 = vmatprep.subr.mxu0 0.0
    %1409 = vmatpush1.msra.mxu0 0.0
    %1410 = vmatprep.subr.mxu0 0.0
    %1411 = vmatpush1.msra.mxu0 0.0
    %1412 = vmatprep.subr.mxu0 0.0
    %1413 = vmatpush1.msra.mxu0 0.0
    %1414 = vmatprep.subr.mxu0 0.0
    %1415 = vmatpush1.msra.mxu0 0.0
    %1416 = vmatprep.subr.mxu0 0.0
    %1417 = vmatpush1.msra.mxu0 0.0
    %1418 = vmatprep.subr.mxu0 0.0
    %1419 = vmatpush1.msra.mxu0 0.0
    %1420 = vmatprep.mubr.f32.mxu0 0.0
    %1421 = vmatmul.mubr.f32.gmra.mrb[0].mxu0 %v1354
    %v1422 = vpop.f32.mrb[0].mxu0
    %v1423 = vadd.f32 0.0, %v1422
    %v1424 = vpop.f32.mrb[0].mxu0
    %1425 = vdwg.mxu0
    %v1426 = vadd.f32 %v1314, %v1423
    %v1427 = vld [vmem:[#allocation2 + $0x2] sm:$0x1]
    %v1428 = vld [vmem:[#allocation2 + $0x6] sm:$0x1]
    %v1429 = vld [vmem:[#allocation2 + $0xa] sm:$0x1]
    %v1430 = vld [vmem:[#allocation2 + $0xe] sm:$0x1]
    %v1431 = vld [vmem:[#allocation2 + $0x12] sm:$0x1]
    %v1432 = vld [vmem:[#allocation2 + $0x16] sm:$0x1]
    %v1433 = vld [vmem:[#allocation2 + $0x1a] sm:$0x1]
    %v1434 = vld [vmem:[#allocation2 + $0x1e] sm:$0x1]
    %s1435 = scalar_lea.vmem %s3, 128
    %v1436 = vld [vmem:[%s1435] sm:$0xff]
    %v1437 = vld [vmem:[%s1435 + $0x8] sm:$0xff]
    %v1438 = vld [vmem:[%s1435 + $0x10] sm:$0xff]
    %v1439 = vld [vmem:[%s1435 + $0x18] sm:$0xff]
    %v1440 = vld [vmem:[%s1435 + $0x20] sm:$0xff]
    %v1441 = vld [vmem:[%s1435 + $0x28] sm:$0xff]
    %v1442 = vld [vmem:[%s1435 + $0x30] sm:$0xff]
    %v1443 = vld [vmem:[%s1435 + $0x38] sm:$0xff]
    %v1452 = vrot.slane %v1428, 7
    %v1453 = vsel %vm1221, %v1452, %v1427
    %v1454 = vrot.slane %v1429, 6
    %v1455 = vsel %vm1224, %v1454, %v1453
    %v1456 = vrot.slane %v1430, 5
    %v1457 = vsel %vm1227, %v1456, %v1455
    %v1458 = vrot.slane %v1431, 4
    %v1459 = vsel %vm1230, %v1458, %v1457
    %v1460 = vrot.slane %v1432, 3
    %v1461 = vsel %vm1233, %v1460, %v1459
    %v1462 = vrot.slane %v1433, 2
    %v1463 = vsel %vm1236, %v1462, %v1461
    %v1464 = vrot.slane %v1434, 1
    %v1465 = vsel %vm1239, %v1464, %v1463
    %v1466 = vsel %vm1241, %v1465, 0
    %1468 = vmatprep.subr.mxu0 0.0
    %1469 = vmatpush1.msra.mxu0 %v1436
    %1470 = vmatprep.subr.mxu0 0.0
    %1471 = vmatpush1.msra.mxu0 %v1437
    %1472 = vmatprep.subr.mxu0 0.0
    %1473 = vmatpush1.msra.mxu0 %v1438
    %1474 = vmatprep.subr.mxu0 0.0
    %1475 = vmatpush1.msra.mxu0 %v1439
    %1476 = vmatprep.subr.mxu0 0.0
    %1477 = vmatpush1.msra.mxu0 %v1440
    %1478 = vmatprep.subr.mxu0 0.0
    %1479 = vmatpush1.msra.mxu0 %v1441
    %1480 = vmatprep.subr.mxu0 0.0
    %1481 = vmatpush1.msra.mxu0 %v1442
    %1482 = vmatprep.subr.mxu0 0.0
    %1483 = vmatpush1.msra.mxu0 %v1443
    %1484 = vmatprep.subr.mxu0 0.0
    %1485 = vmatpush1.msra.mxu0 0.0
    %1486 = vmatprep.subr.mxu0 0.0
    %1487 = vmatpush1.msra.mxu0 0.0
    %1488 = vmatprep.subr.mxu0 0.0
    %1489 = vmatpush1.msra.mxu0 0.0
    %1490 = vmatprep.subr.mxu0 0.0
    %1491 = vmatpush1.msra.mxu0 0.0
    %1492 = vmatprep.subr.mxu0 0.0
    %1493 = vmatpush1.msra.mxu0 0.0
    %1494 = vmatprep.subr.mxu0 0.0
    %1495 = vmatpush1.msra.mxu0 0.0
    %1496 = vmatprep.subr.mxu0 0.0
    %1497 = vmatpush1.msra.mxu0 0.0
    %1498 = vmatprep.subr.mxu0 0.0
    %1499 = vmatpush1.msra.mxu0 0.0
    %1500 = vmatprep.subr.mxu0 0.0
    %1501 = vmatpush1.msra.mxu0 0.0
    %1502 = vmatprep.subr.mxu0 0.0
    %1503 = vmatpush1.msra.mxu0 0.0
    %1504 = vmatprep.subr.mxu0 0.0
    %1505 = vmatpush1.msra.mxu0 0.0
    %1506 = vmatprep.subr.mxu0 0.0
    %1507 = vmatpush1.msra.mxu0 0.0
    %1508 = vmatprep.subr.mxu0 0.0
    %1509 = vmatpush1.msra.mxu0 0.0
    %1510 = vmatprep.subr.mxu0 0.0
    %1511 = vmatpush1.msra.mxu0 0.0
    %1512 = vmatprep.subr.mxu0 0.0
    %1513 = vmatpush1.msra.mxu0 0.0
    %1514 = vmatprep.subr.mxu0 0.0
    %1515 = vmatpush1.msra.mxu0 0.0
    %1516 = vmatprep.subr.mxu0 0.0
    %1517 = vmatpush1.msra.mxu0 0.0
    %1518 = vmatprep.subr.mxu0 0.0
    %1519 = vmatpush1.msra.mxu0 0.0
    %1520 = vmatprep.subr.mxu0 0.0
    %1521 = vmatpush1.msra.mxu0 0.0
    %1522 = vmatprep.subr.mxu0 0.0
    %1523 = vmatpush1.msra.mxu0 0.0
    %1524 = vmatprep.subr.mxu0 0.0
    %1525 = vmatpush1.msra.mxu0 0.0
    %1526 = vmatprep.subr.mxu0 0.0
    %1527 = vmatpush1.msra.mxu0 0.0
    %1528 = vmatprep.subr.mxu0 0.0
    %1529 = vmatpush1.msra.mxu0 0.0
    %1530 = vmatprep.subr.mxu0 0.0
    %1531 = vmatpush1.msra.mxu0 0.0
    %1532 = vmatprep.mubr.f32.mxu0 0.0
    %1533 = vmatmul.mubr.f32.gmra.mrb[0].mxu0 %v1466
    %v1534 = vpop.f32.mrb[0].mxu0
    %v1535 = vadd.f32 0.0, %v1534
    %v1536 = vpop.f32.mrb[0].mxu0
    %1537 = vdwg.mxu0
    %v1538 = vadd.f32 %v1426, %v1535
    %v1539 = vld [vmem:[#allocation2 + $0x3] sm:$0x1]
    %v1540 = vld [vmem:[#allocation2 + $0x7] sm:$0x1]
    %v1541 = vld [vmem:[#allocation2 + $0xb] sm:$0x1]
    %v1542 = vld [vmem:[#allocation2 + $0xf] sm:$0x1]
    %v1543 = vld [vmem:[#allocation2 + $0x13] sm:$0x1]
    %v1544 = vld [vmem:[#allocation2 + $0x17] sm:$0x1]
    %v1545 = vld [vmem:[#allocation2 + $0x1b] sm:$0x1]
    %v1546 = vld [vmem:[#allocation2 + $0x1f] sm:$0x1]
    %s1547 = scalar_lea.vmem %s3, 192
    %v1548 = vld [vmem:[%s1547] sm:$0xff]
    %v1549 = vld [vmem:[%s1547 + $0x8] sm:$0xff]
    %v1550 = vld [vmem:[%s1547 + $0x10] sm:$0xff]
    %v1551 = vld [vmem:[%s1547 + $0x18] sm:$0xff]
    %v1552 = vld [vmem:[%s1547 + $0x20] sm:$0xff]
    %v1553 = vld [vmem:[%s1547 + $0x28] sm:$0xff]
    %v1554 = vld [vmem:[%s1547 + $0x30] sm:$0xff]
    %v1555 = vld [vmem:[%s1547 + $0x38] sm:$0xff]
    %v1564 = vrot.slane %v1540, 7
    %v1565 = vsel %vm1221, %v1564, %v1539
    %v1566 = vrot.slane %v1541, 6
    %v1567 = vsel %vm1224, %v1566, %v1565
    %v1568 = vrot.slane %v1542, 5
    %v1569 = vsel %vm1227, %v1568, %v1567
    %v1570 = vrot.slane %v1543, 4
    %v1571 = vsel %vm1230, %v1570, %v1569
    %v1572 = vrot.slane %v1544, 3
    %v1573 = vsel %vm1233, %v1572, %v1571
    %v1574 = vrot.slane %v1545, 2
    %v1575 = vsel %vm1236, %v1574, %v1573
    %v1576 = vrot.slane %v1546, 1
    %v1577 = vsel %vm1239, %v1576, %v1575
    %v1578 = vsel %vm1241, %v1577, 0
    %1580 = vmatprep.subr.mxu0 0.0
    %1581 = vmatpush1.msra.mxu0 %v1548
    %1582 = vmatprep.subr.mxu0 0.0
    %1583 = vmatpush1.msra.mxu0 %v1549
    %1584 = vmatprep.subr.mxu0 0.0
    %1585 = vmatpush1.msra.mxu0 %v1550
    %1586 = vmatprep.subr.mxu0 0.0
    %1587 = vmatpush1.msra.mxu0 %v1551
    %1588 = vmatprep.subr.mxu0 0.0
    %1589 = vmatpush1.msra.mxu0 %v1552
    %1590 = vmatprep.subr.mxu0 0.0
    %1591 = vmatpush1.msra.mxu0 %v1553
    %1592 = vmatprep.subr.mxu0 0.0
    %1593 = vmatpush1.msra.mxu0 %v1554
    %1594 = vmatprep.subr.mxu0 0.0
    %1595 = vmatpush1.msra.mxu0 %v1555
    %1596 = vmatprep.subr.mxu0 0.0
    %1597 = vmatpush1.msra.mxu0 0.0
    %1598 = vmatprep.subr.mxu0 0.0
    %1599 = vmatpush1.msra.mxu0 0.0
    %1600 = vmatprep.subr.mxu0 0.0
    %1601 = vmatpush1.msra.mxu0 0.0
    %1602 = vmatprep.subr.mxu0 0.0
    %1603 = vmatpush1.msra.mxu0 0.0
    %1604 = vmatprep.subr.mxu0 0.0
    %1605 = vmatpush1.msra.mxu0 0.0
    %1606 = vmatprep.subr.mxu0 0.0
    %1607 = vmatpush1.msra.mxu0 0.0
    %1608 = vmatprep.subr.mxu0 0.0
    %1609 = vmatpush1.msra.mxu0 0.0
    %1610 = vmatprep.subr.mxu0 0.0
    %1611 = vmatpush1.msra.mxu0 0.0
    %1612 = vmatprep.subr.mxu0 0.0
    %1613 = vmatpush1.msra.mxu0 0.0
    %1614 = vmatprep.subr.mxu0 0.0
    %1615 = vmatpush1.msra.mxu0 0.0
    %1616 = vmatprep.subr.mxu0 0.0
    %1617 = vmatpush1.msra.mxu0 0.0
    %1618 = vmatprep.subr.mxu0 0.0
    %1619 = vmatpush1.msra.mxu0 0.0
    %1620 = vmatprep.subr.mxu0 0.0
    %1621 = vmatpush1.msra.mxu0 0.0
    %1622 = vmatprep.subr.mxu0 0.0
    %1623 = vmatpush1.msra.mxu0 0.0
    %1624 = vmatprep.subr.mxu0 0.0
    %1625 = vmatpush1.msra.mxu0 0.0
    %1626 = vmatprep.subr.mxu0 0.0
    %1627 = vmatpush1.msra.mxu0 0.0
    %1628 = vmatprep.subr.mxu0 0.0
    %1629 = vmatpush1.msra.mxu0 0.0
    %1630 = vmatprep.subr.mxu0 0.0
    %1631 = vmatpush1.msra.mxu0 0.0
    %1632 = vmatprep.subr.mxu0 0.0
    %1633 = vmatpush1.msra.mxu0 0.0
    %1634 = vmatprep.subr.mxu0 0.0
    %1635 = vmatpush1.msra.mxu0 0.0
    %1636 = vmatprep.subr.mxu0 0.0
    %1637 = vmatpush1.msra.mxu0 0.0
    %1638 = vmatprep.subr.mxu0 0.0
    %1639 = vmatpush1.msra.mxu0 0.0
    %1640 = vmatprep.subr.mxu0 0.0
    %1641 = vmatpush1.msra.mxu0 0.0
    %1642 = vmatprep.subr.mxu0 0.0
    %1643 = vmatpush1.msra.mxu0 0.0
    %1644 = vmatprep.mubr.f32.mxu0 0.0
    %1645 = vmatmul.mubr.f32.gmra.mrb[0].mxu0 %v1578
    %v1646 = vpop.f32.mrb[0].mxu0
    %v1647 = vadd.f32 0.0, %v1646
    %v1648 = vpop.f32.mrb[0].mxu0
    %1649 = vdwg.mxu0
    %v1650 = vadd.f32 %v1538, %v1647
    %vm1651 = vcmask 261120
    %1652 = vst.msk [vmem:[#allocation6] sm:$0xff] %vm1651, %v1650
    // Predicated region
    $region29: #{tpu_custom_call.1} parent=1 // pred_check
      _
    $region30: #{tpu_custom_call.1} parent=1 // pred_check_branch
      %1654 = sbr.rel (0) target = $region32
    $region31: #{tpu_custom_call.1} parent=1 // pred_region
      %s1656 = ssub.s32 128, 128
      %1657 = vsyncadd [#allocation4], %s1656
      %s1659 = sshll.u32 [#allocation6], 4
      %s1660 = int_to_ptr.vmem [resolvable:$true] %s1659
      %1662 = dma.vmem_to_hbm [thread:$0]  %s1660, 128, %s4, [#allocation4]
    $region32: #{tpu_custom_call.1} parent=1 // pred_fallthru
      _
    // Predicated region
    $region33: #{tpu_custom_call.1} parent=1 // pred_check
      _
    $region34: #{tpu_custom_call.1} parent=1 // pred_check_branch
      %1664 = sbr.rel (0) target = $region36
    $region35: #{tpu_custom_call.1} parent=1 // pred_region
      %1665 = dma.done [#allocation4], 128
    $region36: #{tpu_custom_call.1} parent=1 // pred_fallthru
      _
    %1666 = vsyncpa [#allocation4], 1
    %1667 = vsyncpa [#allocation5], 1

</llo_original>
